<compile_context>
chip_gen: v7x
topology: tpu7x:2x2x1
jax: 0.10.0
libtpu: 0.0.40
codegen_flags: <defaults>
</compile_context>

<pallas_src>
import jax
import jax.numpy as jnp
from jax.experimental import pallas as pl

# ---------------- problem sizes (small, consistent with the module) -------
B = 2          # batch
S = 8          # EHR sequence length
DIN = 16       # raw EHR feature dim (input to the simplified EHR encoder)
E = 32         # embedding_size
MID = 32       # mid_size (packing assumes MID == E)
C = 8          # num_classes
TIME_STEP = 2  # GGNN propagation steps

BC = B * C     # 16  stacked "node" rows
BS = B * S     # 16  stacked sequence rows

# ---- small slab row offsets (width E = 32), all slice starts 8-aligned ----
R_WEHR = 0                       # (DIN, E)   EHR encoder weight
R_W1 = DIN                       # (E, MID)   W1
R_BIAS = DIN + E                 # (4, E)     [behr ; b1 ; w2^T ; b2-bcast]
R_LAB = R_BIAS + 8               # (BC, E)    label embeddings tiled over B
R_ADJ = R_LAB + BC               # (2BC, BC)  block-diag [A_in ; A_out]
R_MASK = R_ADJ + 2 * BC          # (BC, BS)   0 in-block / -1e30 off-block
R_P = R_MASK + BC                # (BC, BS)   segment select/sum matrix
SMALL_ROWS = R_P + BC            # 136

# ---- wide slab row offsets (width 6E = 192) -------------------------------
R_WTOP = 0                       # (2E, 6E)   [W3|W4|W5] rows hit by a_in
R_WBOT = 2 * E                   # (2E, 6E)   [W3|W4|W5] rows hit by a_out
R_U = 4 * E                      # (2E, 6E)   [U3|U4|U5]
R_FC = 6 * E                     # (BC, 6E)   [fcw_a | fcw_b | fcb | 0...] tiled
R_GB = R_FC + BC                 # (1, 6E)    [b3|b4|b5]
WIDE_ROWS = R_GB + 1             # 209


# ---------------------------- Pallas kernel -------------------------------
def kgenet_kernel(x_ref, small_ref, wide_ref, out_ref):
    f32 = jnp.float32

    # ---------- EHR encoder + attention-score projection (both batches) ----
    x2 = x_ref[...]                                      # (BS, DIN)
    wehr = small_ref[R_WEHR:R_WEHR + DIN, :]             # (DIN, E)
    w1 = small_ref[R_W1:R_W1 + E, :]                     # (E, MID)
    bias4 = small_ref[R_BIAS:R_BIAS + 4, :]              # (4, E)
    behr = bias4[0:1, :]
    b1 = bias4[1:2, :]
    w2row = bias4[2:3, :]                                # W2^T
    b2 = bias4[3:4, 0:1]

    H = jnp.tanh(jnp.dot(x2, wehr, preferred_element_type=f32) + behr)   # (BS, E)
    T = jnp.tanh(jnp.dot(H, w1, preferred_element_type=f32) + b1)        # (BS, MID)
    s = jnp.sum(T * w2row, axis=-1, keepdims=True) + b2                  # (BS, 1)

    # ---------- label attention, batched via segment matrix P --------------
    # softmax is shift-invariant, so a single global max stabilizes both
    # per-batch softmaxes at once.
    e = jnp.exp(s - jnp.max(s, axis=0, keepdims=True))                   # (BS, 1)
    P = small_ref[R_P:R_P + BC, 0:BS]                                    # (BC, BS)
    ne = jnp.dot(P, jnp.concatenate([e * H, e], axis=-1),
                 preferred_element_type=f32)                             # (BC, E+1)
    lab_att = ne[:, 0:E] / ne[:, E:E + 1]                                # (BC, E)

    # ---------- cross attention, block-diagonal over the batch -------------
    L2 = small_ref[R_LAB:R_LAB + BC, :]                                  # (BC, E)
    cs = jax.lax.dot_general(L2, H, (((1,), (1,)), ((), ())),
                             preferred_element_type=f32)                 # (BC, BS)
    cs = cs + small_ref[R_MASK:R_MASK + BC, 0:BS]                        # -1e30 off-block
    cs = cs - jnp.max(cs, axis=-1, keepdims=True)
    ce = jnp.exp(cs)
    cw = ce / jnp.sum(ce, axis=-1, keepdims=True)                        # (BC, BS) block-diag
    cross = jnp.dot(cw, H, preferred_element_type=f32)                   # (BC, E)

    attn_feat = jnp.concatenate([lab_att, cross], axis=-1)               # (BC, 2E)

    # ---------- GGNN propagation, both batches stacked ----------------------
    A_blk = small_ref[R_ADJ:R_ADJ + 2 * BC, 0:BC]                        # (2BC, BC)
    b_zrh = jnp.broadcast_to(wide_ref[R_GB:R_GB + 1, :], (BC, 6 * E))    # hoisted bias

    nodes = attn_feat
    for _ in range(TIME_STEP):
        # one fused adjacency matmul for both a_in and a_out (and both batches)
        a = jnp.dot(A_blk, nodes, preferred_element_type=f32)            # (2BC, 2E)
        # av @ [W3|W4|W5] == a_in @ W_top + a_out @ W_bot (big weights stay
        # as ref views so they are loaded right next to each matmul push).
        preW = (jnp.dot(a[0:BC, :], wide_ref[R_WTOP:R_WTOP + 2 * E, :],
                        preferred_element_type=f32)
                + jnp.dot(a[BC:2 * BC, :], wide_ref[R_WBOT:R_WBOT + 2 * E, :],
                          preferred_element_type=f32)
                + b_zrh)                                                 # (BC, 6E)
        preU = jnp.dot(nodes, wide_ref[R_U:R_U + 2 * E, 0:4 * E],
                       preferred_element_type=f32)                      # (BC, 4E)
        zr = jax.nn.sigmoid(preW[:, 0:4 * E] + preU)                    # fused z/r gate
        z = zr[:, 0:2 * E]
        r = zr[:, 2 * E:4 * E]
        h = jnp.tanh(preW[:, 4 * E:6 * E]
                     + jnp.dot(r * nodes,
                               wide_ref[R_U:R_U + 2 * E, 4 * E:6 * E],
                               preferred_element_type=f32))             # (BC, 2E)
        nodes = nodes + z * (h - nodes)                                 # (1-z)*n + z*h

    # ---------- per-class fc heads + single fused output store -------------
    fcw_a = wide_ref[R_FC:R_FC + BC, 0:2 * E]                            # (BC, 2E)
    fcw_b = wide_ref[R_FC:R_FC + BC, 2 * E:4 * E]                        # (BC, 2E)
    fcb = wide_ref[R_FC:R_FC + BC, 4 * E:4 * E + 1]                      # (BC, 1)
    logit = (jnp.sum(attn_feat * fcw_a, axis=-1, keepdims=True)
             + jnp.sum(nodes * fcw_b, axis=-1, keepdims=True)
             + fcb)                                                      # (BC, 1)

    # one store: cols 0:BS = block-diag cross-attention weights, col BS = logits
    out_ref[...] = jnp.concatenate([cw, logit], axis=-1)                 # (BC, BS+1)


# ------------------------- host-side parameter packing ----------------------
def pack_params(params):
    (wehr, behr, w1, b1, w2, b2, lab, ain, aout,
     w3w, u3, b3, w4w, u4, b4, w5w, u5, b5, fcw, fcb) = params
    assert E == MID, "packing assumes mid_size == embedding_size"
    f32 = jnp.float32
    eyeB = jnp.eye(B, dtype=f32)

    # ---- small slab (width E) ----
    enc = jnp.concatenate([wehr, w1], axis=0)                         # (DIN+E, E)
    bias4 = jnp.concatenate(
        [behr, b1, w2.T, jnp.broadcast_to(b2, (1, E))], axis=0)       # (4, E)
    pad4 = jnp.zeros((4, E), f32)
    lab2 = jnp.tile(lab, (B, 1))                                      # (BC, E)
    a_blk = jnp.concatenate(
        [jnp.kron(eyeB, ain), jnp.kron(eyeB, aout)], axis=0)          # (2BC, BC)
    blk_sel = jnp.kron(eyeB, jnp.ones((C, S), f32))                   # (BC, BS) 0/1
    mask = (blk_sel - 1.0) * 1e30                                     # 0 / -1e30

    def padw(m):
        return jnp.pad(m, ((0, 0), (0, E - m.shape[1])))

    small = jnp.concatenate(
        [enc, bias4, pad4, lab2, padw(a_blk), padw(mask), padw(blk_sel)], axis=0)
    assert small.shape == (SMALL_ROWS, E)

    # ---- wide slab (width 6E) ----
    gate_w = jnp.concatenate([w3w, w4w, w5w], axis=1)                 # (4E, 6E)
    gate_u = jnp.concatenate([u3, u4, u5], axis=1)                    # (2E, 6E)
    gate_b = jnp.concatenate([b3, b4, b5], axis=1)                    # (1, 6E)
    fc_blk = jnp.zeros((BC, 6 * E), f32)
    fc_blk = fc_blk.at[:, 0:2 * E].set(jnp.tile(fcw[:, :2 * E], (B, 1)))
    fc_blk = fc_blk.at[:, 2 * E:4 * E].set(jnp.tile(fcw[:, 2 * E:], (B, 1)))
    fc_blk = fc_blk.at[:, 4 * E:4 * E + 1].set(jnp.tile(fcb.T, (B, 1)))
    wide = jnp.concatenate([gate_w, gate_u, fc_blk, gate_b], axis=0)  # (209, 192)
    assert wide.shape == (WIDE_ROWS, 6 * E)

    return small, wide


# ------------------------------ wrapper ------------------------------------
@jax.jit
def kgenet_forward(x, small_slab, wide_slab):
    x2 = x.reshape(B * S, DIN)
    out = pl.pallas_call(
        kgenet_kernel,
        out_shape=jax.ShapeDtypeStruct((BC, BS + 1), jnp.float32),
    )(x2, small_slab, wide_slab)
    logits = out[:, BS].reshape(B, C)
    cw = jnp.stack(
        [out[b * C:(b + 1) * C, b * S:(b + 1) * S] for b in range(B)], axis=0)
    return logits, cw


# -------------------------- pure-JAX reference ------------------------------
def kgenet_reference(x, params):
    (wehr, behr, w1, b1, w2, b2, lab, ain, aout,
     w3w, u3, b3, w4w, u4, b4, w5w, u5, b5, fcw, fcb) = params
    H = jnp.tanh(jnp.einsum('bsd,de->bse', x, wehr) + behr)
    T = jnp.tanh(H @ w1 + b1)
    scores = T @ w2 + b2                                   # (B, S, 1)
    att = jax.nn.softmax(scores, axis=1)
    lab_att = jnp.einsum('bsi,bse->bie', att, H)           # (B, 1, E)
    cs = jnp.einsum('ce,bse->bcs', lab, H)
    cwt = jax.nn.softmax(cs, axis=-1)
    cross = jnp.einsum('bcs,bse->bce', cwt, H)
    feat = jnp.concatenate([jnp.broadcast_to(lab_att, cross.shape), cross], -1)
    nodes = feat
    for _ in range(TIME_STEP):
        av = jnp.concatenate([jnp.einsum('cd,bde->bce', ain, nodes),
                              jnp.einsum('cd,bde->bce', aout, nodes)], -1)
        zv = jax.nn.sigmoid(av @ w3w + nodes @ u3 + b3)
        rv = jax.nn.sigmoid(av @ w4w + nodes @ u4 + b4)
        hv = jnp.tanh(av @ w5w + (rv * nodes) @ u5 + b5)
        nodes = (1.0 - zv) * nodes + zv * hv
    outf = jnp.concatenate([feat, nodes], -1)
    logits = jnp.einsum('bcf,cf->bc', outf, fcw) + fcb[0]
    return logits, cwt


# ------------------------------- main --------------------------------------
def make_params(key):
    ks = jax.random.split(key, 24)

    def init(k, shape, scale=0.1):
        return (scale * jax.random.normal(k, shape)).astype(jnp.float32)

    wehr = init(ks[0], (DIN, E));      behr = init(ks[1], (1, E))
    w1 = init(ks[2], (E, MID));        b1 = init(ks[3], (1, MID))
    w2 = init(ks[4], (MID, 1));        b2 = init(ks[5], (1, 1))
    lab = init(ks[6], (C, E))
    adj = jax.random.uniform(ks[7], (C, C)).astype(jnp.float32)
    ain, aout = adj, adj.T
    w3w = init(ks[8], (4 * E, 2 * E)); u3 = init(ks[9], (2 * E, 2 * E))
    b3 = init(ks[10], (1, 2 * E))
    w4w = init(ks[11], (4 * E, 2 * E)); u4 = init(ks[12], (2 * E, 2 * E))
    b4 = init(ks[13], (1, 2 * E))
    w5w = init(ks[14], (4 * E, 2 * E)); u5 = init(ks[15], (2 * E, 2 * E))
    b5 = init(ks[16], (1, 2 * E))
    fcw = init(ks[17], (C, 4 * E));     fcb = init(ks[18], (1, C))
    return (wehr, behr, w1, b1, w2, b2, lab, ain, aout,
            w3w, u3, b3, w4w, u4, b4, w5w, u5, b5, fcw, fcb)


if __name__ == "__main__":
    key = jax.random.PRNGKey(0)
    kx, kp = jax.random.split(key)
    x = jax.random.normal(kx, (B, S, DIN), dtype=jnp.float32)
    params = make_params(kp)

    small_slab, wide_slab = jax.block_until_ready(pack_params(params))
    logits, cross_w = jax.block_until_ready(
        kgenet_forward(x, small_slab, wide_slab))

    # reference in full-f32 matmul precision so the tolerance can be tight
    with jax.default_matmul_precision("highest"):
        ref_logits, ref_cw = kgenet_reference(x, params)
    ref_logits = jax.block_until_ready(ref_logits)

    assert logits.shape == (B, C) and cross_w.shape == (B, C, S)
    assert jnp.allclose(logits, ref_logits, rtol=5e-3, atol=5e-3)
    assert jnp.allclose(cross_w, ref_cw, rtol=5e-3, atol=5e-3)
    print("KERNEL_OK")
</pallas_src>

<mosaic_0001>
module attributes {stable_mosaic.version = 11 : i64} {
  func.func @kgenet_kernel(%arg0: memref<16x16xf32, #tpu.memory_space<vmem>>, %arg1: memref<136x32xf32, #tpu.memory_space<vmem>>, %arg2: memref<209x192xf32, #tpu.memory_space<vmem>>, %arg3: memref<16x17xf32, #tpu.memory_space<vmem>>) attributes {dimension_semantics = [], scalar_prefetch = 0 : i64, scratch_operands = 0 : i64, tpu.core_type = #tpu.core_type<tc>} {
    %c0 = arith.constant 0 : index
    %c0_0 = arith.constant 0 : index
    %0 = vector.load %arg0[%c0, %c0_0] : memref<16x16xf32, #tpu.memory_space<vmem>>, vector<16x16xf32>
    %c0_1 = arith.constant 0 : index
    %c0_2 = arith.constant 0 : index
    %1 = vector.load %arg1[%c0_1, %c0_2] : memref<136x32xf32, #tpu.memory_space<vmem>>, vector<16x32xf32>
    %c16 = arith.constant 16 : index
    %c0_3 = arith.constant 0 : index
    %2 = vector.load %arg1[%c16, %c0_3] : memref<136x32xf32, #tpu.memory_space<vmem>>, vector<32x32xf32>
    %c48 = arith.constant 48 : index
    %c0_4 = arith.constant 0 : index
    %3 = vector.load %arg1[%c48, %c0_4] : memref<136x32xf32, #tpu.memory_space<vmem>>, vector<4x32xf32>
    %4 = vector.extract_strided_slice %3 {offsets = [0, 0], sizes = [1, 32], strides = [1, 1]} : vector<4x32xf32> to vector<1x32xf32>
    %5 = vector.extract_strided_slice %3 {offsets = [1, 0], sizes = [1, 32], strides = [1, 1]} : vector<4x32xf32> to vector<1x32xf32>
    %6 = vector.extract_strided_slice %3 {offsets = [2, 0], sizes = [1, 32], strides = [1, 1]} : vector<4x32xf32> to vector<1x32xf32>
    %7 = vector.extract_strided_slice %3 {offsets = [3, 0], sizes = [1, 1], strides = [1, 1]} : vector<4x32xf32> to vector<1x1xf32>
    %cst = arith.constant dense<0.000000e+00> : vector<16x32xf32>
    %8 = tpu.matmul %0, %1, %cst {dimension_numbers = #tpu.dot_dimension_numbers<[1], [0], [0], [1], [0, 0, 1, 1], [], []>} : vector<16x16xf32>, vector<16x32xf32>, vector<16x32xf32> -> vector<16x32xf32>
    %9 = vector.broadcast %4 : vector<1x32xf32> to vector<16x32xf32>
    %10 = arith.addf %8, %9 : vector<16x32xf32>
    %11 = math.tanh %10 : vector<16x32xf32>
    %cst_5 = arith.constant dense<0.000000e+00> : vector<16x32xf32>
    %12 = tpu.matmul %11, %2, %cst_5 {dimension_numbers = #tpu.dot_dimension_numbers<[1], [0], [0], [1], [0, 0, 1, 1], [], []>} : vector<16x32xf32>, vector<32x32xf32>, vector<16x32xf32> -> vector<16x32xf32>
    %13 = vector.broadcast %5 : vector<1x32xf32> to vector<16x32xf32>
    %14 = arith.addf %12, %13 : vector<16x32xf32>
    %15 = math.tanh %14 : vector<16x32xf32>
    %16 = vector.broadcast %6 : vector<1x32xf32> to vector<16x32xf32>
    %17 = arith.mulf %15, %16 : vector<16x32xf32>
    %cst_6 = arith.constant dense<0.000000e+00> : vector<16xf32>
    %18 = vector.multi_reduction <add>, %17, %cst_6 [1] : vector<16x32xf32> to vector<16xf32>
    %19 = vector.shape_cast %18 : vector<16xf32> to vector<16x1xf32>
    %20 = vector.broadcast %7 : vector<1x1xf32> to vector<16x1xf32>
    %21 = arith.addf %19, %20 : vector<16x1xf32>
    %cst_7 = arith.constant dense<0xFF800000> : vector<1xf32>
    %22 = vector.multi_reduction <maximumf>, %21, %cst_7 [0] : vector<16x1xf32> to vector<1xf32>
    %23 = vector.shape_cast %22 : vector<1xf32> to vector<1x1xf32>
    %24 = vector.broadcast %23 : vector<1x1xf32> to vector<16x1xf32>
    %25 = arith.subf %21, %24 : vector<16x1xf32>
    %26 = math.exp %25 : vector<16x1xf32>
    %c120 = arith.constant 120 : index
    %c0_8 = arith.constant 0 : index
    %27 = vector.load %arg1[%c120, %c0_8] : memref<136x32xf32, #tpu.memory_space<vmem>>, vector<16x16xf32>
    %28 = vector.broadcast %26 : vector<16x1xf32> to vector<16x32xf32>
    %29 = arith.mulf %28, %11 : vector<16x32xf32>
    %30 = tpu.concatenate %29, %26 in 1 : vector<16x32xf32>, vector<16x1xf32> -> vector<16x33xf32>
    %cst_9 = arith.constant dense<0.000000e+00> : vector<16x33xf32>
    %31 = tpu.matmul %27, %30, %cst_9 {dimension_numbers = #tpu.dot_dimension_numbers<[1], [0], [0], [1], [0, 0, 1, 1], [], []>} : vector<16x16xf32>, vector<16x33xf32>, vector<16x33xf32> -> vector<16x33xf32>
    %32 = vector.extract_strided_slice %31 {offsets = [0, 0], sizes = [16, 32], strides = [1, 1]} : vector<16x33xf32> to vector<16x32xf32>
    %33 = vector.extract_strided_slice %31 {offsets = [0, 32], sizes = [16, 1], strides = [1, 1]} : vector<16x33xf32> to vector<16x1xf32>
    %34 = vector.broadcast %33 : vector<16x1xf32> to vector<16x32xf32>
    %35 = arith.divf %32, %34 : vector<16x32xf32>
    %c56 = arith.constant 56 : index
    %c0_10 = arith.constant 0 : index
    %36 = vector.load %arg1[%c56, %c0_10] : memref<136x32xf32, #tpu.memory_space<vmem>>, vector<16x32xf32>
    %cst_11 = arith.constant dense<0.000000e+00> : vector<16x16xf32>
    %37 = tpu.matmul %36, %11, %cst_11 {dimension_numbers = #tpu.dot_dimension_numbers<[1], [1], [0], [0], [0, 0, 1, 0], [], []>} : vector<16x32xf32>, vector<16x32xf32>, vector<16x16xf32> -> vector<16x16xf32>
    %c104 = arith.constant 104 : index
    %c0_12 = arith.constant 0 : index
    %38 = vector.load %arg1[%c104, %c0_12] : memref<136x32xf32, #tpu.memory_space<vmem>>, vector<16x16xf32>
    %39 = arith.addf %37, %38 : vector<16x16xf32>
    %cst_13 = arith.constant dense<0xFF800000> : vector<16xf32>
    %40 = vector.multi_reduction <maximumf>, %39, %cst_13 [1] : vector<16x16xf32> to vector<16xf32>
    %41 = vector.shape_cast %40 : vector<16xf32> to vector<16x1xf32>
    %42 = vector.broadcast %41 : vector<16x1xf32> to vector<16x16xf32>
    %43 = arith.subf %39, %42 : vector<16x16xf32>
    %44 = math.exp %43 : vector<16x16xf32>
    %cst_14 = arith.constant dense<0.000000e+00> : vector<16xf32>
    %45 = vector.multi_reduction <add>, %44, %cst_14 [1] : vector<16x16xf32> to vector<16xf32>
    %46 = vector.shape_cast %45 : vector<16xf32> to vector<16x1xf32>
    %47 = vector.broadcast %46 : vector<16x1xf32> to vector<16x16xf32>
    %48 = arith.divf %44, %47 : vector<16x16xf32>
    %cst_15 = arith.constant dense<0.000000e+00> : vector<16x32xf32>
    %49 = tpu.matmul %48, %11, %cst_15 {dimension_numbers = #tpu.dot_dimension_numbers<[1], [0], [0], [1], [0, 0, 1, 1], [], []>} : vector<16x16xf32>, vector<16x32xf32>, vector<16x32xf32> -> vector<16x32xf32>
    %50 = tpu.concatenate %35, %49 in 1 : vector<16x32xf32>, vector<16x32xf32> -> vector<16x64xf32>
    %c72 = arith.constant 72 : index
    %c0_16 = arith.constant 0 : index
    %51 = vector.load %arg1[%c72, %c0_16] : memref<136x32xf32, #tpu.memory_space<vmem>>, vector<32x16xf32>
    %c208 = arith.constant 208 : index
    %c0_17 = arith.constant 0 : index
    %52 = vector.load %arg2[%c208, %c0_17] : memref<209x192xf32, #tpu.memory_space<vmem>>, vector<1x192xf32>
    %53 = vector.shape_cast %52 : vector<1x192xf32> to vector<1x192xf32>
    %54 = vector.broadcast %53 : vector<1x192xf32> to vector<16x192xf32>
    %cst_18 = arith.constant dense<0.000000e+00> : vector<32x64xf32>
    %55 = tpu.matmul %51, %50, %cst_18 {dimension_numbers = #tpu.dot_dimension_numbers<[1], [0], [0], [1], [0, 0, 1, 1], [], []>} : vector<32x16xf32>, vector<16x64xf32>, vector<32x64xf32> -> vector<32x64xf32>
    %56 = vector.extract_strided_slice %55 {offsets = [0, 0], sizes = [16, 64], strides = [1, 1]} : vector<32x64xf32> to vector<16x64xf32>
    %c0_19 = arith.constant 0 : index
    %c0_20 = arith.constant 0 : index
    %57 = vector.load %arg2[%c0_19, %c0_20] : memref<209x192xf32, #tpu.memory_space<vmem>>, vector<64x192xf32>
    %cst_21 = arith.constant dense<0.000000e+00> : vector<16x192xf32>
    %58 = tpu.matmul %56, %57, %cst_21 {dimension_numbers = #tpu.dot_dimension_numbers<[1], [0], [0], [1], [0, 0, 1, 1], [], []>} : vector<16x64xf32>, vector<64x192xf32>, vector<16x192xf32> -> vector<16x192xf32>
    %59 = vector.extract_strided_slice %55 {offsets = [16, 0], sizes = [16, 64], strides = [1, 1]} : vector<32x64xf32> to vector<16x64xf32>
    %c64 = arith.constant 64 : index
    %c0_22 = arith.constant 0 : index
    %60 = vector.load %arg2[%c64, %c0_22] : memref<209x192xf32, #tpu.memory_space<vmem>>, vector<64x192xf32>
    %cst_23 = arith.constant dense<0.000000e+00> : vector<16x192xf32>
    %61 = tpu.matmul %59, %60, %cst_23 {dimension_numbers = #tpu.dot_dimension_numbers<[1], [0], [0], [1], [0, 0, 1, 1], [], []>} : vector<16x64xf32>, vector<64x192xf32>, vector<16x192xf32> -> vector<16x192xf32>
    %62 = arith.addf %58, %61 : vector<16x192xf32>
    %63 = arith.addf %62, %54 : vector<16x192xf32>
    %c128 = arith.constant 128 : index
    %c0_24 = arith.constant 0 : index
    %64 = vector.load %arg2[%c128, %c0_24] : memref<209x192xf32, #tpu.memory_space<vmem>>, vector<64x128xf32>
    %cst_25 = arith.constant dense<0.000000e+00> : vector<16x128xf32>
    %65 = tpu.matmul %50, %64, %cst_25 {dimension_numbers = #tpu.dot_dimension_numbers<[1], [0], [0], [1], [0, 0, 1, 1], [], []>} : vector<16x64xf32>, vector<64x128xf32>, vector<16x128xf32> -> vector<16x128xf32>
    %66 = vector.extract_strided_slice %63 {offsets = [0, 0], sizes = [16, 128], strides = [1, 1]} : vector<16x192xf32> to vector<16x128xf32>
    %67 = arith.addf %66, %65 : vector<16x128xf32>
    %68 = arith.negf %67 : vector<16x128xf32>
    %69 = math.exp %68 : vector<16x128xf32>
    %cst_26 = arith.constant 1.000000e+00 : f32
    %70 = vector.broadcast %cst_26 : f32 to vector<16x128xf32>
    %71 = arith.addf %70, %69 : vector<16x128xf32>
    %72 = arith.divf %70, %71 : vector<16x128xf32>
    %73 = vector.extract_strided_slice %72 {offsets = [0, 0], sizes = [16, 64], strides = [1, 1]} : vector<16x128xf32> to vector<16x64xf32>
    %74 = vector.extract_strided_slice %72 {offsets = [0, 64], sizes = [16, 64], strides = [1, 1]} : vector<16x128xf32> to vector<16x64xf32>
    %75 = vector.extract_strided_slice %63 {offsets = [0, 128], sizes = [16, 64], strides = [1, 1]} : vector<16x192xf32> to vector<16x64xf32>
    %76 = arith.mulf %74, %50 : vector<16x64xf32>
    %c128_27 = arith.constant 128 : index
    %c128_28 = arith.constant 128 : index
    %77 = vector.load %arg2[%c128_27, %c128_28] : memref<209x192xf32, #tpu.memory_space<vmem>>, vector<64x64xf32>
    %cst_29 = arith.constant dense<0.000000e+00> : vector<16x64xf32>
    %78 = tpu.matmul %76, %77, %cst_29 {dimension_numbers = #tpu.dot_dimension_numbers<[1], [0], [0], [1], [0, 0, 1, 1], [], []>} : vector<16x64xf32>, vector<64x64xf32>, vector<16x64xf32> -> vector<16x64xf32>
    %79 = arith.addf %75, %78 : vector<16x64xf32>
    %80 = math.tanh %79 : vector<16x64xf32>
    %81 = arith.subf %80, %50 : vector<16x64xf32>
    %82 = arith.mulf %73, %81 : vector<16x64xf32>
    %83 = arith.addf %50, %82 : vector<16x64xf32>
    %cst_30 = arith.constant dense<0.000000e+00> : vector<32x64xf32>
    %84 = tpu.matmul %51, %83, %cst_30 {dimension_numbers = #tpu.dot_dimension_numbers<[1], [0], [0], [1], [0, 0, 1, 1], [], []>} : vector<32x16xf32>, vector<16x64xf32>, vector<32x64xf32> -> vector<32x64xf32>
    %85 = vector.extract_strided_slice %84 {offsets = [0, 0], sizes = [16, 64], strides = [1, 1]} : vector<32x64xf32> to vector<16x64xf32>
    %c0_31 = arith.constant 0 : index
    %c0_32 = arith.constant 0 : index
    %86 = vector.load %arg2[%c0_31, %c0_32] : memref<209x192xf32, #tpu.memory_space<vmem>>, vector<64x192xf32>
    %cst_33 = arith.constant dense<0.000000e+00> : vector<16x192xf32>
    %87 = tpu.matmul %85, %86, %cst_33 {dimension_numbers = #tpu.dot_dimension_numbers<[1], [0], [0], [1], [0, 0, 1, 1], [], []>} : vector<16x64xf32>, vector<64x192xf32>, vector<16x192xf32> -> vector<16x192xf32>
    %88 = vector.extract_strided_slice %84 {offsets = [16, 0], sizes = [16, 64], strides = [1, 1]} : vector<32x64xf32> to vector<16x64xf32>
    %c64_34 = arith.constant 64 : index
    %c0_35 = arith.constant 0 : index
    %89 = vector.load %arg2[%c64_34, %c0_35] : memref<209x192xf32, #tpu.memory_space<vmem>>, vector<64x192xf32>
    %cst_36 = arith.constant dense<0.000000e+00> : vector<16x192xf32>
    %90 = tpu.matmul %88, %89, %cst_36 {dimension_numbers = #tpu.dot_dimension_numbers<[1], [0], [0], [1], [0, 0, 1, 1], [], []>} : vector<16x64xf32>, vector<64x192xf32>, vector<16x192xf32> -> vector<16x192xf32>
    %91 = arith.addf %87, %90 : vector<16x192xf32>
    %92 = arith.addf %91, %54 : vector<16x192xf32>
    %c128_37 = arith.constant 128 : index
    %c0_38 = arith.constant 0 : index
    %93 = vector.load %arg2[%c128_37, %c0_38] : memref<209x192xf32, #tpu.memory_space<vmem>>, vector<64x128xf32>
    %cst_39 = arith.constant dense<0.000000e+00> : vector<16x128xf32>
    %94 = tpu.matmul %83, %93, %cst_39 {dimension_numbers = #tpu.dot_dimension_numbers<[1], [0], [0], [1], [0, 0, 1, 1], [], []>} : vector<16x64xf32>, vector<64x128xf32>, vector<16x128xf32> -> vector<16x128xf32>
    %95 = vector.extract_strided_slice %92 {offsets = [0, 0], sizes = [16, 128], strides = [1, 1]} : vector<16x192xf32> to vector<16x128xf32>
    %96 = arith.addf %95, %94 : vector<16x128xf32>
    %97 = arith.negf %96 : vector<16x128xf32>
    %98 = math.exp %97 : vector<16x128xf32>
    %cst_40 = arith.constant 1.000000e+00 : f32
    %99 = vector.broadcast %cst_40 : f32 to vector<16x128xf32>
    %100 = arith.addf %99, %98 : vector<16x128xf32>
    %101 = arith.divf %99, %100 : vector<16x128xf32>
    %102 = vector.extract_strided_slice %101 {offsets = [0, 0], sizes = [16, 64], strides = [1, 1]} : vector<16x128xf32> to vector<16x64xf32>
    %103 = vector.extract_strided_slice %101 {offsets = [0, 64], sizes = [16, 64], strides = [1, 1]} : vector<16x128xf32> to vector<16x64xf32>
    %104 = vector.extract_strided_slice %92 {offsets = [0, 128], sizes = [16, 64], strides = [1, 1]} : vector<16x192xf32> to vector<16x64xf32>
    %105 = arith.mulf %103, %83 : vector<16x64xf32>
    %c128_41 = arith.constant 128 : index
    %c128_42 = arith.constant 128 : index
    %106 = vector.load %arg2[%c128_41, %c128_42] : memref<209x192xf32, #tpu.memory_space<vmem>>, vector<64x64xf32>
    %cst_43 = arith.constant dense<0.000000e+00> : vector<16x64xf32>
    %107 = tpu.matmul %105, %106, %cst_43 {dimension_numbers = #tpu.dot_dimension_numbers<[1], [0], [0], [1], [0, 0, 1, 1], [], []>} : vector<16x64xf32>, vector<64x64xf32>, vector<16x64xf32> -> vector<16x64xf32>
    %108 = arith.addf %104, %107 : vector<16x64xf32>
    %109 = math.tanh %108 : vector<16x64xf32>
    %110 = arith.subf %109, %83 : vector<16x64xf32>
    %111 = arith.mulf %102, %110 : vector<16x64xf32>
    %112 = arith.addf %83, %111 : vector<16x64xf32>
    %c192 = arith.constant 192 : index
    %c0_44 = arith.constant 0 : index
    %113 = vector.load %arg2[%c192, %c0_44] : memref<209x192xf32, #tpu.memory_space<vmem>>, vector<16x64xf32>
    %c192_45 = arith.constant 192 : index
    %c64_46 = arith.constant 64 : index
    %114 = vector.load %arg2[%c192_45, %c64_46] : memref<209x192xf32, #tpu.memory_space<vmem>>, vector<16x64xf32>
    %c192_47 = arith.constant 192 : index
    %c128_48 = arith.constant 128 : index
    %115 = vector.load %arg2[%c192_47, %c128_48] : memref<209x192xf32, #tpu.memory_space<vmem>>, vector<16x1xf32>
    %116 = arith.mulf %50, %113 : vector<16x64xf32>
    %cst_49 = arith.constant dense<0.000000e+00> : vector<16xf32>
    %117 = vector.multi_reduction <add>, %116, %cst_49 [1] : vector<16x64xf32> to vector<16xf32>
    %118 = vector.shape_cast %117 : vector<16xf32> to vector<16x1xf32>
    %119 = arith.mulf %112, %114 : vector<16x64xf32>
    %cst_50 = arith.constant dense<0.000000e+00> : vector<16xf32>
    %120 = vector.multi_reduction <add>, %119, %cst_50 [1] : vector<16x64xf32> to vector<16xf32>
    %121 = vector.shape_cast %120 : vector<16xf32> to vector<16x1xf32>
    %122 = arith.addf %118, %121 : vector<16x1xf32>
    %123 = arith.addf %122, %115 : vector<16x1xf32>
    %124 = tpu.concatenate %48, %123 in 1 : vector<16x16xf32>, vector<16x1xf32> -> vector<16x17xf32>
    %c0_51 = arith.constant 0 : index
    %c0_52 = arith.constant 0 : index
    %125 = vector.load %arg3[%c0_51, %c0_52] : memref<16x17xf32, #tpu.memory_space<vmem>>, vector<16x17xf32>
    tpu.vector_store %arg3[%c0_51, %c0_52], %124 {strides = array<i32>} : memref<16x17xf32, #tpu.memory_space<vmem>>, vector<16x17xf32>,
    return
  }
}

</mosaic_0001>

<llo_original>
// kernel: squeeze.1
$region0: #{squeeze.1}
  %s0 = inlined_call_operand.vmem [shape: f32[16], index: 0, kind: input, shape index: {}]
  %s1 = inlined_call_operand.hbm [shape: f32[2,8], index: 1, kind: output, shape index: {}]
  $region1: #{squeeze.1} parent=0
    #allocation0 [shape = 'u8[1024]{0}', space=vmem, size = 0x400, scoped, tag = 'operand span for operand 1']
    #allocation1 [shape = 's32[1]{0}', space=sflag, size = 0x4, scoped, tag = 'scoped memory for squeeze.1']
    #allocation2 [shape = 'u8[4096]{0}', space=vmem, size = 0x1000, scoped, tag = 'scoped mem for output reshape']
    #allocation3 [shape = 'u8[4096]{0}', space=vmem, size = 0x1000, scoped, tag = 'scoped mem for input reshape']
    %2 = vsyncpa [#allocation1], 0
    %s4 = sshllo.u32 0, 1
    %v5 = vld [vmem:[%s0] sm:%s4]
    %6 = vst [vmem:[#allocation3] sm:%s4] %v5
    %v7 = vld [vmem:[#allocation3] sm:$0x1]
    %vm8 = vcmask 64512
    %9 = vst.msk [vmem:[#allocation2] sm:$0x1] %vm8, %v7
    %v10 = vld [vmem:[#allocation3] sm:$0x1]
    %11 = vrot.lane.b32.xlu0 %v10, 120
    %v12 = vpop.permute.xlu0 %11
    %vm13 = vcmask 64512
    %s14 = scalar_lea.vmem [#allocation2], 1
    %15 = vst.msk [vmem:[%s14] sm:$0x1] %vm13, %v12
    %s17 = sshllo.u32 0, 2
    %v19 = vld [vmem:[#allocation2] sm:%s17]
    %s20 = sshllo.u32 0, 2
    %21 = vst [vmem:[#allocation0] sm:%s20] %v19
    %s23 = ssub.s32 32, 32
    %24 = vsyncadd [#allocation1], %s23
    %s26 = sshll.u32 [#allocation0], 4
    %s27 = int_to_ptr.vmem [resolvable:$true] %s26
    %29 = dma.vmem_to_hbm [thread:$0]  %s27, 32, %s1, [#allocation1]
    %30 = dma.done [#allocation1], 32
    %31 = vsyncpa [#allocation1], 1

// kernel: kgenet_forward.1
$region0: #{kgenet_forward.1}
  #allocation0 [shape = 'u32[]', space=smem, size = 0x4, offset = 0x4, fixed_abs, tag = 'smem constant byte address 0x4 - core index']
  #allocation1 [shape = 'u32[144,128]{1,0:T(1,128)}', space=vmem, size = 0x12000, scoped, tag = 'internal scratch']
  %s0 = inlined_call_operand.vmem [shape: f32[16,16], index: 0, kind: input, shape index: {}]
  %s1 = inlined_call_operand.vmem [shape: f32[136,32], index: 1, kind: input, shape index: {}]
  %s2 = inlined_call_operand.vmem [shape: f32[209,192], index: 2, kind: input, shape index: {}]
  %s3 = inlined_call_operand.vmem [shape: f32[16,17], index: 3, kind: output, shape index: {}]
  %s4 = sld [smem:[#allocation0]]
  $region22: #{kgenet_forward.1} parent=0
    _
  %s6 = ssub.s32 1, %s4
  %s7 = scalar_select 0, %s6, %s4
  // Predicated region
  $region2: #{kgenet_forward.1} parent=0 // pred_check
    _
  $region3: #{kgenet_forward.1} parent=0 // pred_check_branch
    %9 = sbr.rel (0) target = $region5
  $region4: #{kgenet_forward.1} parent=0 // pred_region
    _
  $region5: #{kgenet_forward.1} parent=0 // pred_fallthru
    _
  // Predicated region
  $region6: #{kgenet_forward.1} parent=0 // pred_check
    _
  $region7: #{kgenet_forward.1} parent=0 // pred_check_branch
    %11 = sbr.rel (0) target = $region9
  $region8: #{kgenet_forward.1} parent=0 // pred_region
    _
  $region9: #{kgenet_forward.1} parent=0 // pred_fallthru
    _
  // Predicated region
  $region10: #{kgenet_forward.1} parent=0 // pred_check
    _
  $region11: #{kgenet_forward.1} parent=0 // pred_check_branch
    %13 = sbr.rel (0) target = $region13
  $region12: #{kgenet_forward.1} parent=0 // pred_region
    _
  $region13: #{kgenet_forward.1} parent=0 // pred_fallthru
    _
  %v14 = vld [vmem:[%s0] sm:$0xff]
  %v15 = vld [vmem:[%s0 + $0x8] sm:$0xff]
  %v16 = vld [vmem:[%s1] sm:$0xff]
  %v17 = vld [vmem:[%s1 + $0x8] sm:$0xff]
  %v18 = vld [vmem:[%s1 + $0x10] sm:$0xff]
  %v19 = vld [vmem:[%s1 + $0x18] sm:$0xff]
  %v20 = vld [vmem:[%s1 + $0x20] sm:$0xff]
  %v21 = vld [vmem:[%s1 + $0x28] sm:$0xff]
  %v22 = vld [vmem:[%s1 + $0x30] sm:$0xf]
  %v23 = vlaneseq
  %v24 = vshrl.u32 %v23, 7
  %v25 = vsub.s32 0, %v24
  %v26 = vrot.slane %v22, %v25
  %vm27 = vcmask 130048
  %v29 = vsel %vm27, %v14, 0
  %v32 = vsel %vm27, %v15, 0
  %34 = vmatprep.subr.mxu0 0.0
  %35 = vmatpush1.msra.mxu0 %v16
  %36 = vmatprep.subr.mxu0 0.0
  %37 = vmatpush1.msra.mxu0 %v17
  %38 = vmatprep.subr.mxu0 0.0
  %39 = vmatpush1.msra.mxu0 0.0
  %40 = vmatprep.subr.mxu0 0.0
  %41 = vmatpush1.msra.mxu0 0.0
  %42 = vmatprep.subr.mxu0 0.0
  %43 = vmatpush1.msra.mxu0 0.0
  %44 = vmatprep.subr.mxu0 0.0
  %45 = vmatpush1.msra.mxu0 0.0
  %46 = vmatprep.subr.mxu0 0.0
  %47 = vmatpush1.msra.mxu0 0.0
  %48 = vmatprep.subr.mxu0 0.0
  %49 = vmatpush1.msra.mxu0 0.0
  %50 = vmatprep.subr.mxu0 0.0
  %51 = vmatpush1.msra.mxu0 0.0
  %52 = vmatprep.subr.mxu0 0.0
  %53 = vmatpush1.msra.mxu0 0.0
  %54 = vmatprep.subr.mxu0 0.0
  %55 = vmatpush1.msra.mxu0 0.0
  %56 = vmatprep.subr.mxu0 0.0
  %57 = vmatpush1.msra.mxu0 0.0
  %58 = vmatprep.subr.mxu0 0.0
  %59 = vmatpush1.msra.mxu0 0.0
  %60 = vmatprep.subr.mxu0 0.0
  %61 = vmatpush1.msra.mxu0 0.0
  %62 = vmatprep.subr.mxu0 0.0
  %63 = vmatpush1.msra.mxu0 0.0
  %64 = vmatprep.subr.mxu0 0.0
  %65 = vmatpush1.msra.mxu0 0.0
  %66 = vmatprep.subr.mxu0 0.0
  %67 = vmatpush1.msra.mxu0 0.0
  %68 = vmatprep.subr.mxu0 0.0
  %69 = vmatpush1.msra.mxu0 0.0
  %70 = vmatprep.subr.mxu0 0.0
  %71 = vmatpush1.msra.mxu0 0.0
  %72 = vmatprep.subr.mxu0 0.0
  %73 = vmatpush1.msra.mxu0 0.0
  %74 = vmatprep.subr.mxu0 0.0
  %75 = vmatpush1.msra.mxu0 0.0
  %76 = vmatprep.subr.mxu0 0.0
  %77 = vmatpush1.msra.mxu0 0.0
  %78 = vmatprep.subr.mxu0 0.0
  %79 = vmatpush1.msra.mxu0 0.0
  %80 = vmatprep.subr.mxu0 0.0
  %81 = vmatpush1.msra.mxu0 0.0
  %82 = vmatprep.subr.mxu0 0.0
  %83 = vmatpush1.msra.mxu0 0.0
  %84 = vmatprep.subr.mxu0 0.0
  %85 = vmatpush1.msra.mxu0 0.0
  %86 = vmatprep.subr.mxu0 0.0
  %87 = vmatpush1.msra.mxu0 0.0
  %88 = vmatprep.subr.mxu0 0.0
  %89 = vmatpush1.msra.mxu0 0.0
  %90 = vmatprep.subr.mxu0 0.0
  %91 = vmatpush1.msra.mxu0 0.0
  %92 = vmatprep.subr.mxu0 0.0
  %93 = vmatpush1.msra.mxu0 0.0
  %94 = vmatprep.subr.mxu0 0.0
  %95 = vmatpush1.msra.mxu0 0.0
  %96 = vmatprep.subr.mxu0 0.0
  %97 = vmatpush1.msra.mxu0 0.0
  %98 = vmatprep.mubr.f32.mxu0 0.0
  %99 = vmatmul.mubr.f32.gmra.mrb[0].mxu0 %v29
  %v100 = vpop.f32.mrb[0].mxu0
  %v101 = vadd.f32 %v26, %v100
  %v102 = vpop.f32.mrb[0].mxu0
  %103 = vmatprep.mubr.f32.mxu0 0.0
  %104 = vmatmul.mubr.f32.gmra.mrb[0].mxu0 %v32
  %v105 = vpop.f32.mrb[0].mxu0
  %v106 = vadd.f32 %v26, %v105
  %v107 = vpop.f32.mrb[0].mxu0
  %108 = vdwg.mxu0
  %v109 = vtanh.pop %v101
  %v110 = vtanh.pop %v106
  %v111 = vlaneseq
  %v112 = vshrl.u32 %v111, 7
  %v113 = vsub.s32 1, %v112
  %v114 = vrot.slane %v22, %v113
  %vm115 = vcmask 261120
  %v117 = vsel %vm115, %v109, 0
  %v120 = vsel %vm115, %v110, 0
  %122 = vmatprep.subr.mxu0 0.0
  %123 = vmatpush1.msra.mxu0 %v18
  %124 = vmatprep.subr.mxu0 0.0
  %125 = vmatpush1.msra.mxu0 %v19
  %126 = vmatprep.subr.mxu0 0.0
  %127 = vmatpush1.msra.mxu0 %v20
  %128 = vmatprep.subr.mxu0 0.0
  %129 = vmatpush1.msra.mxu0 %v21
  %130 = vmatprep.subr.mxu0 0.0
  %131 = vmatpush1.msra.mxu0 0.0
  %132 = vmatprep.subr.mxu0 0.0
  %133 = vmatpush1.msra.mxu0 0.0
  %134 = vmatprep.subr.mxu0 0.0
  %135 = vmatpush1.msra.mxu0 0.0
  %136 = vmatprep.subr.mxu0 0.0
  %137 = vmatpush1.msra.mxu0 0.0
  %138 = vmatprep.subr.mxu0 0.0
  %139 = vmatpush1.msra.mxu0 0.0
  %140 = vmatprep.subr.mxu0 0.0
  %141 = vmatpush1.msra.mxu0 0.0
  %142 = vmatprep.subr.mxu0 0.0
  %143 = vmatpush1.msra.mxu0 0.0
  %144 = vmatprep.subr.mxu0 0.0
  %145 = vmatpush1.msra.mxu0 0.0
  %146 = vmatprep.subr.mxu0 0.0
  %147 = vmatpush1.msra.mxu0 0.0
  %148 = vmatprep.subr.mxu0 0.0
  %149 = vmatpush1.msra.mxu0 0.0
  %150 = vmatprep.subr.mxu0 0.0
  %151 = vmatpush1.msra.mxu0 0.0
  %152 = vmatprep.subr.mxu0 0.0
  %153 = vmatpush1.msra.mxu0 0.0
  %154 = vmatprep.subr.mxu0 0.0
  %155 = vmatpush1.msra.mxu0 0.0
  %156 = vmatprep.subr.mxu0 0.0
  %157 = vmatpush1.msra.mxu0 0.0
  %158 = vmatprep.subr.mxu0 0.0
  %159 = vmatpush1.msra.mxu0 0.0
  %160 = vmatprep.subr.mxu0 0.0
  %161 = vmatpush1.msra.mxu0 0.0
  %162 = vmatprep.subr.mxu0 0.0
  %163 = vmatpush1.msra.mxu0 0.0
  %164 = vmatprep.subr.mxu0 0.0
  %165 = vmatpush1.msra.mxu0 0.0
  %166 = vmatprep.subr.mxu0 0.0
  %167 = vmatpush1.msra.mxu0 0.0
  %168 = vmatprep.subr.mxu0 0.0
  %169 = vmatpush1.msra.mxu0 0.0
  %170 = vmatprep.subr.mxu0 0.0
  %171 = vmatpush1.msra.mxu0 0.0
  %172 = vmatprep.subr.mxu0 0.0
  %173 = vmatpush1.msra.mxu0 0.0
  %174 = vmatprep.subr.mxu0 0.0
  %175 = vmatpush1.msra.mxu0 0.0
  %176 = vmatprep.subr.mxu0 0.0
  %177 = vmatpush1.msra.mxu0 0.0
  %178 = vmatprep.subr.mxu0 0.0
  %179 = vmatpush1.msra.mxu0 0.0
  %180 = vmatprep.subr.mxu0 0.0
  %181 = vmatpush1.msra.mxu0 0.0
  %182 = vmatprep.subr.mxu0 0.0
  %183 = vmatpush1.msra.mxu0 0.0
  %184 = vmatprep.subr.mxu0 0.0
  %185 = vmatpush1.msra.mxu0 0.0
  %186 = vmatprep.mubr.f32.mxu0 0.0
  %187 = vmatmul.mubr.f32.gmra.mrb[0].mxu0 %v117
  %v188 = vpop.f32.mrb[0].mxu0
  %v189 = vadd.f32 %v114, %v188
  %v190 = vpop.f32.mrb[0].mxu0
  %191 = vmatprep.mubr.f32.mxu0 0.0
  %192 = vmatmul.mubr.f32.gmra.mrb[0].mxu0 %v120
  %v193 = vpop.f32.mrb[0].mxu0
  %v194 = vadd.f32 %v114, %v193
  %v195 = vpop.f32.mrb[0].mxu0
  %196 = vdwg.mxu0
  %v197 = vtanh.pop %v189
  %v198 = vtanh.pop %v194
  %v199 = vlaneseq
  %v200 = vshrl.u32 %v199, 7
  %v201 = vsub.s32 2, %v200
  %v202 = vrot.slane %v22, %v201
  %v203 = vmul.f32 %v197, %v202
  %v204 = vmul.f32 %v198, %v202
  %v205 = vsel %vm115, %v203, 0.0
  %206 = vadd.xlane.f32.xlu0 %v205
  %v207 = vpop.xlane.xlu0 %206
  %v208 = vsel %vm115, %v204, 0.0
  %209 = vadd.xlane.f32.xlu0 %v208
  %v210 = vpop.xlane.xlu0 %209
  %v211 = vlaneseq
  %v212 = vshrl.u32 %v211, 7
  %v213 = vsub.s32 3, %v212
  %v214 = vrot.slane %v22, %v213
  %v215 = vadd.f32 %v207, %v214
  %v216 = vadd.f32 %v210, %v214
  %vm217 = vcmask 7168
  %v218 = vsel %vm217, %v215, -inf
  %v219 = vsel %vm217, %v216, -inf
  %v220 = vmax.f32 %v218, %v219
  %v221 = vrot.slane %v220, 4
  %v222 = vmax.f32 %v220, %v221
  %v223 = vrot.slane %v222, 2
  %v224 = vmax.f32 %v222, %v223
  %v225 = vrot.slane %v224, 1
  %v226 = vmax.f32 %v224, %v225
  %v227 = vsub.f32 %v215, %v226
  %v228 = vsub.f32 %v216, %v226
  %v229 = vmul.f32 %v227, 1.442695
  %v230 = vpow.pop %v229
  %v231 = vmul.f32 %v228, 1.442695
  %v232 = vpow.pop %v231
  %v233 = vld [vmem:[%s1 + $0x78] sm:$0xff]
  %v234 = vld [vmem:[%s1 + $0x80] sm:$0xff]
  %236 = vset.pattern.permute.xlu0 0
  %237 = vperm.xlu0 %236, %v230
  %v238 = vpop.permute.xlu0 %237
  %241 = vset.pattern.permute.xlu0 0
  %242 = vperm.xlu0 %241, %v232
  %v243 = vpop.permute.xlu0 %242
  %v245 = vmul.f32 %v238, %v109
  %v246 = vmul.f32 %v243, %v110
  %247 = vrot.lane.b32.xlu0 %v230, 32
  %v248 = vpop.permute.xlu0 %247
  %249 = vrot.lane.b32.xlu0 %v232, 32
  %v250 = vpop.permute.xlu0 %249
  %v253 = vsel %vm115, %v245, %v248
  %v254 = vsel %vm115, %v246, %v250
  %v256 = vsel %vm27, %v233, 0
  %v259 = vsel %vm27, %v234, 0
  %261 = vmatprep.subr.mxu0 0.0
  %262 = vmatpush1.msra.mxu0 %v253
  %263 = vmatprep.subr.mxu0 0.0
  %264 = vmatpush1.msra.mxu0 %v254
  %265 = vmatprep.subr.mxu0 0.0
  %266 = vmatpush1.msra.mxu0 0.0
  %267 = vmatprep.subr.mxu0 0.0
  %268 = vmatpush1.msra.mxu0 0.0
  %269 = vmatprep.subr.mxu0 0.0
  %270 = vmatpush1.msra.mxu0 0.0
  %271 = vmatprep.subr.mxu0 0.0
  %272 = vmatpush1.msra.mxu0 0.0
  %273 = vmatprep.subr.mxu0 0.0
  %274 = vmatpush1.msra.mxu0 0.0
  %275 = vmatprep.subr.mxu0 0.0
  %276 = vmatpush1.msra.mxu0 0.0
  %277 = vmatprep.subr.mxu0 0.0
  %278 = vmatpush1.msra.mxu0 0.0
  %279 = vmatprep.subr.mxu0 0.0
  %280 = vmatpush1.msra.mxu0 0.0
  %281 = vmatprep.subr.mxu0 0.0
  %282 = vmatpush1.msra.mxu0 0.0
  %283 = vmatprep.subr.mxu0 0.0
  %284 = vmatpush1.msra.mxu0 0.0
  %285 = vmatprep.subr.mxu0 0.0
  %286 = vmatpush1.msra.mxu0 0.0
  %287 = vmatprep.subr.mxu0 0.0
  %288 = vmatpush1.msra.mxu0 0.0
  %289 = vmatprep.subr.mxu0 0.0
  %290 = vmatpush1.msra.mxu0 0.0
  %291 = vmatprep.subr.mxu0 0.0
  %292 = vmatpush1.msra.mxu0 0.0
  %293 = vmatprep.subr.mxu0 0.0
  %294 = vmatpush1.msra.mxu0 0.0
  %295 = vmatprep.subr.mxu0 0.0
  %296 = vmatpush1.msra.mxu0 0.0
  %297 = vmatprep.subr.mxu0 0.0
  %298 = vmatpush1.msra.mxu0 0.0
  %299 = vmatprep.subr.mxu0 0.0
  %300 = vmatpush1.msra.mxu0 0.0
  %301 = vmatprep.subr.mxu0 0.0
  %302 = vmatpush1.msra.mxu0 0.0
  %303 = vmatprep.subr.mxu0 0.0
  %304 = vmatpush1.msra.mxu0 0.0
  %305 = vmatprep.subr.mxu0 0.0
  %306 = vmatpush1.msra.mxu0 0.0
  %307 = vmatprep.subr.mxu0 0.0
  %308 = vmatpush1.msra.mxu0 0.0
  %309 = vmatprep.subr.mxu0 0.0
  %310 = vmatpush1.msra.mxu0 0.0
  %311 = vmatprep.subr.mxu0 0.0
  %312 = vmatpush1.msra.mxu0 0.0
  %313 = vmatprep.subr.mxu0 0.0
  %314 = vmatpush1.msra.mxu0 0.0
  %315 = vmatprep.subr.mxu0 0.0
  %316 = vmatpush1.msra.mxu0 0.0
  %317 = vmatprep.subr.mxu0 0.0
  %318 = vmatpush1.msra.mxu0 0.0
  %319 = vmatprep.subr.mxu0 0.0
  %320 = vmatpush1.msra.mxu0 0.0
  %321 = vmatprep.subr.mxu0 0.0
  %322 = vmatpush1.msra.mxu0 0.0
  %323 = vmatprep.subr.mxu0 0.0
  %324 = vmatpush1.msra.mxu0 0.0
  %325 = vmatprep.mubr.f32.mxu0 0.0
  %326 = vmatmul.mubr.f32.gmra.mrb[0].mxu0 %v256
  %v327 = vpop.f32.mrb[0].mxu0
  %v328 = vadd.f32 0.0, %v327
  %v329 = vpop.f32.mrb[0].mxu0
  %330 = vmatprep.mubr.f32.mxu0 0.0
  %331 = vmatmul.mubr.f32.gmra.mrb[0].mxu0 %v259
  %v332 = vpop.f32.mrb[0].mxu0
  %v333 = vadd.f32 0.0, %v332
  %v334 = vpop.f32.mrb[0].mxu0
  %335 = vdwg.mxu0
  %337 = vset.pattern.permute.xlu0 32
  %338 = vperm.xlu0 %337, %v328
  %v339 = vpop.permute.xlu0 %338
  %342 = vset.pattern.permute.xlu0 32
  %343 = vperm.xlu0 %342, %v333
  %v344 = vpop.permute.xlu0 %343
  %v346 = vrcp.pop %v339
  %v347 = vmul.f32 %v328, %v346
  %v348 = vrcp.pop %v344
  %v349 = vmul.f32 %v333, %v348
  %v350 = vld [vmem:[%s1 + $0x38] sm:$0xff]
  %v351 = vld [vmem:[%s1 + $0x40] sm:$0xff]
  %v352 = vld [vmem:[%s1 + $0x68] sm:$0xff]
  %v353 = vld [vmem:[%s1 + $0x70] sm:$0xff]
  %v355 = vsel %vm115, %v350, 0
  %v358 = vsel %vm115, %v351, 0
  %360 = vmatprep.subr.mxu0 0.0
  %361 = vmatpush1.xpose.msra.mxu0 %v117
  %362 = vmatprep.subr.mxu0 0.0
  %363 = vmatpush1.xpose.msra.mxu0 %v120
  %364 = vmatprep.subr.mxu0 0.0
  %365 = vmatpush1.xpose.msra.mxu0 0.0
  %366 = vmatprep.subr.mxu0 0.0
  %367 = vmatpush1.xpose.msra.mxu0 0.0
  %368 = vmatprep.subr.mxu0 0.0
  %369 = vmatpush1.xpose.msra.mxu0 0.0
  %370 = vmatprep.subr.mxu0 0.0
  %371 = vmatpush1.xpose.msra.mxu0 0.0
  %372 = vmatprep.subr.mxu0 0.0
  %373 = vmatpush1.xpose.msra.mxu0 0.0
  %374 = vmatprep.subr.mxu0 0.0
  %375 = vmatpush1.xpose.msra.mxu0 0.0
  %376 = vmatprep.subr.mxu0 0.0
  %377 = vmatpush1.xpose.msra.mxu0 0.0
  %378 = vmatprep.subr.mxu0 0.0
  %379 = vmatpush1.xpose.msra.mxu0 0.0
  %380 = vmatprep.subr.mxu0 0.0
  %381 = vmatpush1.xpose.msra.mxu0 0.0
  %382 = vmatprep.subr.mxu0 0.0
  %383 = vmatpush1.xpose.msra.mxu0 0.0
  %384 = vmatprep.subr.mxu0 0.0
  %385 = vmatpush1.xpose.msra.mxu0 0.0
  %386 = vmatprep.subr.mxu0 0.0
  %387 = vmatpush1.xpose.msra.mxu0 0.0
  %388 = vmatprep.subr.mxu0 0.0
  %389 = vmatpush1.xpose.msra.mxu0 0.0
  %390 = vmatprep.subr.mxu0 0.0
  %391 = vmatpush1.xpose.msra.mxu0 0.0
  %392 = vmatprep.subr.mxu0 0.0
  %393 = vmatpush1.xpose.msra.mxu0 0.0
  %394 = vmatprep.subr.mxu0 0.0
  %395 = vmatpush1.xpose.msra.mxu0 0.0
  %396 = vmatprep.subr.mxu0 0.0
  %397 = vmatpush1.xpose.msra.mxu0 0.0
  %398 = vmatprep.subr.mxu0 0.0
  %399 = vmatpush1.xpose.msra.mxu0 0.0
  %400 = vmatprep.subr.mxu0 0.0
  %401 = vmatpush1.xpose.msra.mxu0 0.0
  %402 = vmatprep.subr.mxu0 0.0
  %403 = vmatpush1.xpose.msra.mxu0 0.0
  %404 = vmatprep.subr.mxu0 0.0
  %405 = vmatpush1.xpose.msra.mxu0 0.0
  %406 = vmatprep.subr.mxu0 0.0
  %407 = vmatpush1.xpose.msra.mxu0 0.0
  %408 = vmatprep.subr.mxu0 0.0
  %409 = vmatpush1.xpose.msra.mxu0 0.0
  %410 = vmatprep.subr.mxu0 0.0
  %411 = vmatpush1.xpose.msra.mxu0 0.0
  %412 = vmatprep.subr.mxu0 0.0
  %413 = vmatpush1.xpose.msra.mxu0 0.0
  %414 = vmatprep.subr.mxu0 0.0
  %415 = vmatpush1.xpose.msra.mxu0 0.0
  %416 = vmatprep.subr.mxu0 0.0
  %417 = vmatpush1.xpose.msra.mxu0 0.0
  %418 = vmatprep.subr.mxu0 0.0
  %419 = vmatpush1.xpose.msra.mxu0 0.0
  %420 = vmatprep.subr.mxu0 0.0
  %421 = vmatpush1.xpose.msra.mxu0 0.0
  %422 = vmatprep.subr.mxu0 0.0
  %423 = vmatpush1.xpose.msra.mxu0 0.0
  %424 = vmatprep.mubr.f32.mxu0 0.0
  %425 = vmatmul.mubr.f32.gmra.mrb[0].mxu0 %v355
  %v426 = vpop.f32.mrb[0].mxu0
  %v427 = vadd.f32 %v352, %v426
  %v428 = vpop.f32.mrb[0].mxu0
  %429 = vmatprep.mubr.f32.mxu0 0.0
  %430 = vmatmul.mubr.f32.gmra.mrb[0].mxu0 %v358
  %v431 = vpop.f32.mrb[0].mxu0
  %v432 = vadd.f32 %v353, %v431
  %v433 = vpop.f32.mrb[0].mxu0
  %434 = vdwg.mxu0
  %v435 = vsel %vm27, %v427, -inf
  %436 = vmax.xlane.f32.xlu0 %v435
  %v437 = vpop.xlane.xlu0 %436
  %v438 = vsel %vm27, %v432, -inf
  %439 = vmax.xlane.f32.xlu0 %v438
  %v440 = vpop.xlane.xlu0 %439
  %v441 = vsub.f32 %v427, %v437
  %v442 = vsub.f32 %v432, %v440
  %v443 = vmul.f32 %v441, 1.442695
  %v444 = vpow.pop %v443
  %v445 = vmul.f32 %v442, 1.442695
  %v446 = vpow.pop %v445
  %v447 = vsel %vm27, %v444, 0.0
  %448 = vadd.xlane.f32.xlu0 %v447
  %v449 = vpop.xlane.xlu0 %448
  %v450 = vsel %vm27, %v446, 0.0
  %451 = vadd.xlane.f32.xlu0 %v450
  %v452 = vpop.xlane.xlu0 %451
  %v453 = vrcp.pop %v449
  %v454 = vmul.f32 %v444, %v453
  %v455 = vrcp.pop %v452
  %v456 = vmul.f32 %v446, %v455
  %v458 = vsel %vm27, %v454, 0
  %v461 = vsel %vm27, %v456, 0
  %463 = vmatprep.subr.mxu0 0.0
  %464 = vmatpush1.msra.mxu0 %v109
  %465 = vmatprep.subr.mxu0 0.0
  %466 = vmatpush1.msra.mxu0 %v110
  %467 = vmatprep.subr.mxu0 0.0
  %468 = vmatpush1.msra.mxu0 0.0
  %469 = vmatprep.subr.mxu0 0.0
  %470 = vmatpush1.msra.mxu0 0.0
  %471 = vmatprep.subr.mxu0 0.0
  %472 = vmatpush1.msra.mxu0 0.0
  %473 = vmatprep.subr.mxu0 0.0
  %474 = vmatpush1.msra.mxu0 0.0
  %475 = vmatprep.subr.mxu0 0.0
  %476 = vmatpush1.msra.mxu0 0.0
  %477 = vmatprep.subr.mxu0 0.0
  %478 = vmatpush1.msra.mxu0 0.0
  %479 = vmatprep.subr.mxu0 0.0
  %480 = vmatpush1.msra.mxu0 0.0
  %481 = vmatprep.subr.mxu0 0.0
  %482 = vmatpush1.msra.mxu0 0.0
  %483 = vmatprep.subr.mxu0 0.0
  %484 = vmatpush1.msra.mxu0 0.0
  %485 = vmatprep.subr.mxu0 0.0
  %486 = vmatpush1.msra.mxu0 0.0
  %487 = vmatprep.subr.mxu0 0.0
  %488 = vmatpush1.msra.mxu0 0.0
  %489 = vmatprep.subr.mxu0 0.0
  %490 = vmatpush1.msra.mxu0 0.0
  %491 = vmatprep.subr.mxu0 0.0
  %492 = vmatpush1.msra.mxu0 0.0
  %493 = vmatprep.subr.mxu0 0.0
  %494 = vmatpush1.msra.mxu0 0.0
  %495 = vmatprep.subr.mxu0 0.0
  %496 = vmatpush1.msra.mxu0 0.0
  %497 = vmatprep.subr.mxu0 0.0
  %498 = vmatpush1.msra.mxu0 0.0
  %499 = vmatprep.subr.mxu0 0.0
  %500 = vmatpush1.msra.mxu0 0.0
  %501 = vmatprep.subr.mxu0 0.0
  %502 = vmatpush1.msra.mxu0 0.0
  %503 = vmatprep.subr.mxu0 0.0
  %504 = vmatpush1.msra.mxu0 0.0
  %505 = vmatprep.subr.mxu0 0.0
  %506 = vmatpush1.msra.mxu0 0.0
  %507 = vmatprep.subr.mxu0 0.0
  %508 = vmatpush1.msra.mxu0 0.0
  %509 = vmatprep.subr.mxu0 0.0
  %510 = vmatpush1.msra.mxu0 0.0
  %511 = vmatprep.subr.mxu0 0.0
  %512 = vmatpush1.msra.mxu0 0.0
  %513 = vmatprep.subr.mxu0 0.0
  %514 = vmatpush1.msra.mxu0 0.0
  %515 = vmatprep.subr.mxu0 0.0
  %516 = vmatpush1.msra.mxu0 0.0
  %517 = vmatprep.subr.mxu0 0.0
  %518 = vmatpush1.msra.mxu0 0.0
  %519 = vmatprep.subr.mxu0 0.0
  %520 = vmatpush1.msra.mxu0 0.0
  %521 = vmatprep.subr.mxu0 0.0
  %522 = vmatpush1.msra.mxu0 0.0
  %523 = vmatprep.subr.mxu0 0.0
  %524 = vmatpush1.msra.mxu0 0.0
  %525 = vmatprep.subr.mxu0 0.0
  %526 = vmatpush1.msra.mxu0 0.0
  %527 = vmatprep.mubr.f32.mxu0 0.0
  %528 = vmatmul.mubr.f32.gmra.mrb[0].mxu0 %v458
  %v529 = vpop.f32.mrb[0].mxu0
  %v530 = vadd.f32 0.0, %v529
  %v531 = vpop.f32.mrb[0].mxu0
  %532 = vmatprep.mubr.f32.mxu0 0.0
  %533 = vmatmul.mubr.f32.gmra.mrb[0].mxu0 %v461
  %v534 = vpop.f32.mrb[0].mxu0
  %v535 = vadd.f32 0.0, %v534
  %v536 = vpop.f32.mrb[0].mxu0
  %537 = vdwg.mxu0
  %540 = vrot.lane.b32.xlu0 %v530, 32
  %v541 = vpop.permute.xlu0 %540
  %542 = vrot.lane.b32.xlu0 %v535, 32
  %v543 = vpop.permute.xlu0 %542
  %v546 = vsel %vm115, %v347, %v541
  %v547 = vsel %vm115, %v349, %v543
  %v548 = vld [vmem:[%s1 + $0x48] sm:$0xff]
  %v549 = vld [vmem:[%s1 + $0x50] sm:$0xff]
  %v550 = vld [vmem:[%s1 + $0x58] sm:$0xff]
  %v551 = vld [vmem:[%s1 + $0x60] sm:$0xff]
  %s552 = scalar_lea.vmem %s2, 416
  %v553 = vld [vmem:[%s552] ss:$8 sm:$0x3]
  %v555 = vlaneseq
  %v556 = vshrl.u32 %v555, 7
  %v557 = vsub.s32 0, %v556
  %v558 = vrot.slane %v553, %v557
  %v559 = vlaneseq
  %v560 = vshrl.u32 %v559, 7
  %v561 = vsub.s32 1, %v560
  %v562 = vrot.slane %v553, %v561
  %v566 = vsel %vm27, %v548, 0
  %v569 = vsel %vm27, %v549, 0
  %v572 = vsel %vm27, %v550, 0
  %v575 = vsel %vm27, %v551, 0
  %577 = vmatprep.subr.mxu0 0.0
  %578 = vmatpush1.msra.mxu0 %v546
  %579 = vmatprep.subr.mxu0 0.0
  %580 = vmatpush1.msra.mxu0 %v547
  %581 = vmatprep.subr.mxu0 0.0
  %582 = vmatpush1.msra.mxu0 0.0
  %583 = vmatprep.subr.mxu0 0.0
  %584 = vmatpush1.msra.mxu0 0.0
  %585 = vmatprep.subr.mxu0 0.0
  %586 = vmatpush1.msra.mxu0 0.0
  %587 = vmatprep.subr.mxu0 0.0
  %588 = vmatpush1.msra.mxu0 0.0
  %589 = vmatprep.subr.mxu0 0.0
  %590 = vmatpush1.msra.mxu0 0.0
  %591 = vmatprep.subr.mxu0 0.0
  %592 = vmatpush1.msra.mxu0 0.0
  %593 = vmatprep.subr.mxu0 0.0
  %594 = vmatpush1.msra.mxu0 0.0
  %595 = vmatprep.subr.mxu0 0.0
  %596 = vmatpush1.msra.mxu0 0.0
  %597 = vmatprep.subr.mxu0 0.0
  %598 = vmatpush1.msra.mxu0 0.0
  %599 = vmatprep.subr.mxu0 0.0
  %600 = vmatpush1.msra.mxu0 0.0
  %601 = vmatprep.subr.mxu0 0.0
  %602 = vmatpush1.msra.mxu0 0.0
  %603 = vmatprep.subr.mxu0 0.0
  %604 = vmatpush1.msra.mxu0 0.0
  %605 = vmatprep.subr.mxu0 0.0
  %606 = vmatpush1.msra.mxu0 0.0
  %607 = vmatprep.subr.mxu0 0.0
  %608 = vmatpush1.msra.mxu0 0.0
  %609 = vmatprep.subr.mxu0 0.0
  %610 = vmatpush1.msra.mxu0 0.0
  %611 = vmatprep.subr.mxu0 0.0
  %612 = vmatpush1.msra.mxu0 0.0
  %613 = vmatprep.subr.mxu0 0.0
  %614 = vmatpush1.msra.mxu0 0.0
  %615 = vmatprep.subr.mxu0 0.0
  %616 = vmatpush1.msra.mxu0 0.0
  %617 = vmatprep.subr.mxu0 0.0
  %618 = vmatpush1.msra.mxu0 0.0
  %619 = vmatprep.subr.mxu0 0.0
  %620 = vmatpush1.msra.mxu0 0.0
  %621 = vmatprep.subr.mxu0 0.0
  %622 = vmatpush1.msra.mxu0 0.0
  %623 = vmatprep.subr.mxu0 0.0
  %624 = vmatpush1.msra.mxu0 0.0
  %625 = vmatprep.subr.mxu0 0.0
  %626 = vmatpush1.msra.mxu0 0.0
  %627 = vmatprep.subr.mxu0 0.0
  %628 = vmatpush1.msra.mxu0 0.0
  %629 = vmatprep.subr.mxu0 0.0
  %630 = vmatpush1.msra.mxu0 0.0
  %631 = vmatprep.subr.mxu0 0.0
  %632 = vmatpush1.msra.mxu0 0.0
  %633 = vmatprep.subr.mxu0 0.0
  %634 = vmatpush1.msra.mxu0 0.0
  %635 = vmatprep.subr.mxu0 0.0
  %636 = vmatpush1.msra.mxu0 0.0
  %637 = vmatprep.subr.mxu0 0.0
  %638 = vmatpush1.msra.mxu0 0.0
  %639 = vmatprep.subr.mxu0 0.0
  %640 = vmatpush1.msra.mxu0 0.0
  %641 = vmatprep.mubr.f32.mxu0 0.0
  %642 = vmatmul.mubr.f32.gmra.mrb[0].mxu0 %v566
  %v643 = vpop.f32.mrb[0].mxu0
  %v644 = vadd.f32 0.0, %v643
  %v645 = vpop.f32.mrb[0].mxu0
  %646 = vmatprep.mubr.f32.mxu0 0.0
  %647 = vmatmul.mubr.f32.gmra.mrb[0].mxu0 %v569
  %v648 = vpop.f32.mrb[0].mxu0
  %v649 = vadd.f32 0.0, %v648
  %v650 = vpop.f32.mrb[0].mxu0
  %651 = vmatprep.mubr.f32.mxu0 0.0
  %652 = vmatmul.mubr.f32.gmra.mrb[0].mxu0 %v572
  %v653 = vpop.f32.mrb[0].mxu0
  %v654 = vadd.f32 0.0, %v653
  %v655 = vpop.f32.mrb[0].mxu0
  %656 = vmatprep.mubr.f32.mxu0 0.0
  %657 = vmatmul.mubr.f32.gmra.mrb[0].mxu0 %v575
  %v658 = vpop.f32.mrb[0].mxu0
  %v659 = vadd.f32 0.0, %v658
  %v660 = vpop.f32.mrb[0].mxu0
  %661 = vdwg.mxu0
  %v662 = vld [vmem:[%s2] sm:$0xff]
  %v663 = vld [vmem:[%s2 + $0x8] sm:$0xff]
  %v664 = vld [vmem:[%s2 + $0x10] sm:$0xff]
  %v665 = vld [vmem:[%s2 + $0x18] sm:$0xff]
  %v666 = vld [vmem:[%s2 + $0x20] sm:$0xff]
  %v667 = vld [vmem:[%s2 + $0x28] sm:$0xff]
  %v668 = vld [vmem:[%s2 + $0x30] sm:$0xff]
  %v669 = vld [vmem:[%s2 + $0x38] sm:$0xff]
  %v670 = vld [vmem:[%s2 + $0x40] sm:$0xff]
  %v671 = vld [vmem:[%s2 + $0x48] sm:$0xff]
  %v672 = vld [vmem:[%s2 + $0x50] sm:$0xff]
  %v673 = vld [vmem:[%s2 + $0x58] sm:$0xff]
  %v674 = vld [vmem:[%s2 + $0x60] sm:$0xff]
  %v675 = vld [vmem:[%s2 + $0x68] sm:$0xff]
  %v676 = vld [vmem:[%s2 + $0x70] sm:$0xff]
  %v677 = vld [vmem:[%s2 + $0x78] sm:$0xff]
  %v678 = vld [vmem:[%s2 + $0x80] sm:$0xff]
  %v679 = vld [vmem:[%s2 + $0x88] sm:$0xff]
  %v680 = vld [vmem:[%s2 + $0x90] sm:$0xff]
  %v681 = vld [vmem:[%s2 + $0x98] sm:$0xff]
  %v682 = vld [vmem:[%s2 + $0xa0] sm:$0xff]
  %v683 = vld [vmem:[%s2 + $0xa8] sm:$0xff]
  %v684 = vld [vmem:[%s2 + $0xb0] sm:$0xff]
  %v685 = vld [vmem:[%s2 + $0xb8] sm:$0xff]
  %v686 = vld [vmem:[%s2 + $0xc0] sm:$0xff]
  %v687 = vld [vmem:[%s2 + $0xc8] sm:$0xff]
  %v688 = vld [vmem:[%s2 + $0xd0] sm:$0xff]
  %v689 = vld [vmem:[%s2 + $0xd8] sm:$0xff]
  %v690 = vld [vmem:[%s2 + $0xe0] sm:$0xff]
  %v691 = vld [vmem:[%s2 + $0xe8] sm:$0xff]
  %v692 = vld [vmem:[%s2 + $0xf0] sm:$0xff]
  %v693 = vld [vmem:[%s2 + $0xf8] sm:$0xff]
  %vm694 = vcmask 523264
  %v696 = vsel %vm694, %v654, 0
  %v699 = vsel %vm694, %v659, 0
  %701 = vmatprep.subr.mxu0 %v679
  %702 = vmatpush1.msra.mxu0 %v678
  %703 = vmatprep.subr.mxu0 %v681
  %704 = vmatpush1.msra.mxu0 %v680
  %705 = vmatprep.subr.mxu0 %v683
  %706 = vmatpush1.msra.mxu0 %v682
  %707 = vmatprep.subr.mxu0 %v685
  %708 = vmatpush1.msra.mxu0 %v684
  %709 = vmatprep.subr.mxu0 %v687
  %710 = vmatpush1.msra.mxu0 %v686
  %711 = vmatprep.subr.mxu0 %v689
  %712 = vmatpush1.msra.mxu0 %v688
  %713 = vmatprep.subr.mxu0 %v691
  %714 = vmatpush1.msra.mxu0 %v690
  %715 = vmatprep.subr.mxu0 %v693
  %716 = vmatpush1.msra.mxu0 %v692
  %717 = vmatprep.subr.mxu0 0.0
  %718 = vmatpush1.msra.mxu0 0.0
  %719 = vmatprep.subr.mxu0 0.0
  %720 = vmatpush1.msra.mxu0 0.0
  %721 = vmatprep.subr.mxu0 0.0
  %722 = vmatpush1.msra.mxu0 0.0
  %723 = vmatprep.subr.mxu0 0.0
  %724 = vmatpush1.msra.mxu0 0.0
  %725 = vmatprep.subr.mxu0 0.0
  %726 = vmatpush1.msra.mxu0 0.0
  %727 = vmatprep.subr.mxu0 0.0
  %728 = vmatpush1.msra.mxu0 0.0
  %729 = vmatprep.subr.mxu0 0.0
  %730 = vmatpush1.msra.mxu0 0.0
  %731 = vmatprep.subr.mxu0 0.0
  %732 = vmatpush1.msra.mxu0 0.0
  %733 = vmatprep.subr.mxu0 0.0
  %734 = vmatpush1.msra.mxu0 0.0
  %735 = vmatprep.subr.mxu0 0.0
  %736 = vmatpush1.msra.mxu0 0.0
  %737 = vmatprep.subr.mxu0 0.0
  %738 = vmatpush1.msra.mxu0 0.0
  %739 = vmatprep.subr.mxu0 0.0
  %740 = vmatpush1.msra.mxu0 0.0
  %741 = vmatprep.subr.mxu0 0.0
  %742 = vmatpush1.msra.mxu0 0.0
  %743 = vmatprep.subr.mxu0 0.0
  %744 = vmatpush1.msra.mxu0 0.0
  %745 = vmatprep.subr.mxu0 0.0
  %746 = vmatpush1.msra.mxu0 0.0
  %747 = vmatprep.subr.mxu0 0.0
  %748 = vmatpush1.msra.mxu0 0.0
  %749 = vmatprep.subr.mxu0 0.0
  %750 = vmatpush1.msra.mxu0 0.0
  %751 = vmatprep.subr.mxu0 0.0
  %752 = vmatpush1.msra.mxu0 0.0
  %753 = vmatprep.subr.mxu0 0.0
  %754 = vmatpush1.msra.mxu0 0.0
  %755 = vmatprep.subr.mxu0 0.0
  %756 = vmatpush1.msra.mxu0 0.0
  %757 = vmatprep.subr.mxu0 0.0
  %758 = vmatpush1.msra.mxu0 0.0
  %759 = vmatprep.subr.mxu0 0.0
  %760 = vmatpush1.msra.mxu0 0.0
  %761 = vmatprep.subr.mxu0 0.0
  %762 = vmatpush1.msra.mxu0 0.0
  %763 = vmatprep.subr.mxu0 0.0
  %764 = vmatpush1.msra.mxu0 0.0
  %765 = vmatprep.mubr.f32.mxu0 0.0
  %766 = vmatmul.mubr.f32.gmra.mrb[0].mxu0 %v696
  %v767 = vpop.f32.mrb[0].mxu0
  %v768 = vadd.f32 0.0, %v767
  %v769 = vpop.f32.mrb[0].mxu0
  %v770 = vadd.f32 0.0, %v769
  %771 = vmatprep.mubr.f32.mxu0 0.0
  %772 = vmatmul.mubr.f32.gmra.mrb[0].mxu0 %v699
  %v773 = vpop.f32.mrb[0].mxu0
  %v774 = vadd.f32 0.0, %v773
  %v775 = vpop.f32.mrb[0].mxu0
  %v776 = vadd.f32 0.0, %v775
  %777 = vdwg.mxu0
  %v779 = vsel %vm694, %v644, 0
  %v782 = vsel %vm694, %v649, 0
  %784 = vmatprep.subr.mxu0 %v663
  %785 = vmatpush1.msra.mxu0 %v662
  %786 = vmatprep.subr.mxu0 %v665
  %787 = vmatpush1.msra.mxu0 %v664
  %788 = vmatprep.subr.mxu0 %v667
  %789 = vmatpush1.msra.mxu0 %v666
  %790 = vmatprep.subr.mxu0 %v669
  %791 = vmatpush1.msra.mxu0 %v668
  %792 = vmatprep.subr.mxu0 %v671
  %793 = vmatpush1.msra.mxu0 %v670
  %794 = vmatprep.subr.mxu0 %v673
  %795 = vmatpush1.msra.mxu0 %v672
  %796 = vmatprep.subr.mxu0 %v675
  %797 = vmatpush1.msra.mxu0 %v674
  %798 = vmatprep.subr.mxu0 %v677
  %799 = vmatpush1.msra.mxu0 %v676
  %800 = vmatprep.subr.mxu0 0.0
  %801 = vmatpush1.msra.mxu0 0.0
  %802 = vmatprep.subr.mxu0 0.0
  %803 = vmatpush1.msra.mxu0 0.0
  %804 = vmatprep.subr.mxu0 0.0
  %805 = vmatpush1.msra.mxu0 0.0
  %806 = vmatprep.subr.mxu0 0.0
  %807 = vmatpush1.msra.mxu0 0.0
  %808 = vmatprep.subr.mxu0 0.0
  %809 = vmatpush1.msra.mxu0 0.0
  %810 = vmatprep.subr.mxu0 0.0
  %811 = vmatpush1.msra.mxu0 0.0
  %812 = vmatprep.subr.mxu0 0.0
  %813 = vmatpush1.msra.mxu0 0.0
  %814 = vmatprep.subr.mxu0 0.0
  %815 = vmatpush1.msra.mxu0 0.0
  %816 = vmatprep.subr.mxu0 0.0
  %817 = vmatpush1.msra.mxu0 0.0
  %818 = vmatprep.subr.mxu0 0.0
  %819 = vmatpush1.msra.mxu0 0.0
  %820 = vmatprep.subr.mxu0 0.0
  %821 = vmatpush1.msra.mxu0 0.0
  %822 = vmatprep.subr.mxu0 0.0
  %823 = vmatpush1.msra.mxu0 0.0
  %824 = vmatprep.subr.mxu0 0.0
  %825 = vmatpush1.msra.mxu0 0.0
  %826 = vmatprep.subr.mxu0 0.0
  %827 = vmatpush1.msra.mxu0 0.0
  %828 = vmatprep.subr.mxu0 0.0
  %829 = vmatpush1.msra.mxu0 0.0
  %830 = vmatprep.subr.mxu0 0.0
  %831 = vmatpush1.msra.mxu0 0.0
  %832 = vmatprep.subr.mxu0 0.0
  %833 = vmatpush1.msra.mxu0 0.0
  %834 = vmatprep.subr.mxu0 0.0
  %835 = vmatpush1.msra.mxu0 0.0
  %836 = vmatprep.subr.mxu0 0.0
  %837 = vmatpush1.msra.mxu0 0.0
  %838 = vmatprep.subr.mxu0 0.0
  %839 = vmatpush1.msra.mxu0 0.0
  %840 = vmatprep.subr.mxu0 0.0
  %841 = vmatpush1.msra.mxu0 0.0
  %842 = vmatprep.subr.mxu0 0.0
  %843 = vmatpush1.msra.mxu0 0.0
  %844 = vmatprep.subr.mxu0 0.0
  %845 = vmatpush1.msra.mxu0 0.0
  %846 = vmatprep.subr.mxu0 0.0
  %847 = vmatpush1.msra.mxu0 0.0
  %848 = vmatprep.mubr.f32.mxu0 0.0
  %849 = vmatmul.mubr.f32.gmra.mrb[0].mxu0 %v779
  %v850 = vpop.f32.mrb[0].mxu0
  %v851 = vadd.f32 %v768, %v850
  %v852 = vpop.f32.mrb[0].mxu0
  %v853 = vadd.f32 %v770, %v852
  %854 = vmatprep.mubr.f32.mxu0 0.0
  %855 = vmatmul.mubr.f32.gmra.mrb[0].mxu0 %v782
  %v856 = vpop.f32.mrb[0].mxu0
  %v857 = vadd.f32 %v774, %v856
  %v858 = vpop.f32.mrb[0].mxu0
  %v859 = vadd.f32 %v776, %v858
  %860 = vdwg.mxu0
  %v861 = vadd.f32 %v851, %v558
  %v862 = vadd.f32 %v853, %v562
  %v863 = vadd.f32 %v857, %v558
  %v864 = vadd.f32 %v859, %v562
  %v865 = vld [vmem:[%s2 + $0x100] sm:$0xff]
  %v866 = vld [vmem:[%s2 + $0x110] sm:$0xff]
  %v867 = vld [vmem:[%s2 + $0x120] sm:$0xff]
  %v868 = vld [vmem:[%s2 + $0x130] sm:$0xff]
  %v869 = vld [vmem:[%s2 + $0x140] sm:$0xff]
  %v870 = vld [vmem:[%s2 + $0x150] sm:$0xff]
  %v871 = vld [vmem:[%s2 + $0x160] sm:$0xff]
  %v872 = vld [vmem:[%s2 + $0x170] sm:$0xff]
  %v874 = vsel %vm694, %v546, 0
  %v877 = vsel %vm694, %v547, 0
  %879 = vmatprep.subr.mxu0 0.0
  %880 = vmatpush1.msra.mxu0 %v865
  %881 = vmatprep.subr.mxu0 0.0
  %882 = vmatpush1.msra.mxu0 %v866
  %883 = vmatprep.subr.mxu0 0.0
  %884 = vmatpush1.msra.mxu0 %v867
  %885 = vmatprep.subr.mxu0 0.0
  %886 = vmatpush1.msra.mxu0 %v868
  %887 = vmatprep.subr.mxu0 0.0
  %888 = vmatpush1.msra.mxu0 %v869
  %889 = vmatprep.subr.mxu0 0.0
  %890 = vmatpush1.msra.mxu0 %v870
  %891 = vmatprep.subr.mxu0 0.0
  %892 = vmatpush1.msra.mxu0 %v871
  %893 = vmatprep.subr.mxu0 0.0
  %894 = vmatpush1.msra.mxu0 %v872
  %895 = vmatprep.subr.mxu0 0.0
  %896 = vmatpush1.msra.mxu0 0.0
  %897 = vmatprep.subr.mxu0 0.0
  %898 = vmatpush1.msra.mxu0 0.0
  %899 = vmatprep.subr.mxu0 0.0
  %900 = vmatpush1.msra.mxu0 0.0
  %901 = vmatprep.subr.mxu0 0.0
  %902 = vmatpush1.msra.mxu0 0.0
  %903 = vmatprep.subr.mxu0 0.0
  %904 = vmatpush1.msra.mxu0 0.0
  %905 = vmatprep.subr.mxu0 0.0
  %906 = vmatpush1.msra.mxu0 0.0
  %907 = vmatprep.subr.mxu0 0.0
  %908 = vmatpush1.msra.mxu0 0.0
  %909 = vmatprep.subr.mxu0 0.0
  %910 = vmatpush1.msra.mxu0 0.0
  %911 = vmatprep.subr.mxu0 0.0
  %912 = vmatpush1.msra.mxu0 0.0
  %913 = vmatprep.subr.mxu0 0.0
  %914 = vmatpush1.msra.mxu0 0.0
  %915 = vmatprep.subr.mxu0 0.0
  %916 = vmatpush1.msra.mxu0 0.0
  %917 = vmatprep.subr.mxu0 0.0
  %918 = vmatpush1.msra.mxu0 0.0
  %919 = vmatprep.subr.mxu0 0.0
  %920 = vmatpush1.msra.mxu0 0.0
  %921 = vmatprep.subr.mxu0 0.0
  %922 = vmatpush1.msra.mxu0 0.0
  %923 = vmatprep.subr.mxu0 0.0
  %924 = vmatpush1.msra.mxu0 0.0
  %925 = vmatprep.subr.mxu0 0.0
  %926 = vmatpush1.msra.mxu0 0.0
  %927 = vmatprep.subr.mxu0 0.0
  %928 = vmatpush1.msra.mxu0 0.0
  %929 = vmatprep.subr.mxu0 0.0
  %930 = vmatpush1.msra.mxu0 0.0
  %931 = vmatprep.subr.mxu0 0.0
  %932 = vmatpush1.msra.mxu0 0.0
  %933 = vmatprep.subr.mxu0 0.0
  %934 = vmatpush1.msra.mxu0 0.0
  %935 = vmatprep.subr.mxu0 0.0
  %936 = vmatpush1.msra.mxu0 0.0
  %937 = vmatprep.subr.mxu0 0.0
  %938 = vmatpush1.msra.mxu0 0.0
  %939 = vmatprep.subr.mxu0 0.0
  %940 = vmatpush1.msra.mxu0 0.0
  %941 = vmatprep.subr.mxu0 0.0
  %942 = vmatpush1.msra.mxu0 0.0
  %943 = vmatprep.mubr.f32.mxu0 0.0
  %944 = vmatmul.mubr.f32.gmra.mrb[0].mxu0 %v874
  %v945 = vpop.f32.mrb[0].mxu0
  %v946 = vadd.f32 0.0, %v945
  %v947 = vpop.f32.mrb[0].mxu0
  %948 = vmatprep.mubr.f32.mxu0 0.0
  %949 = vmatmul.mubr.f32.gmra.mrb[0].mxu0 %v877
  %v950 = vpop.f32.mrb[0].mxu0
  %v951 = vadd.f32 0.0, %v950
  %v952 = vpop.f32.mrb[0].mxu0
  %953 = vdwg.mxu0
  %v954 = vadd.f32 %v861, %v946
  %v955 = vadd.f32 %v863, %v951
  %v956 = vxor.u32 %v954, 2147483648
  %v957 = vxor.u32 %v955, 2147483648
  %v958 = vmul.f32 %v956, 1.442695
  %v959 = vpow.pop %v958
  %v960 = vmul.f32 %v957, 1.442695
  %v961 = vpow.pop %v960
  %v962 = vadd.f32 %v959, 1.0
  %v963 = vadd.f32 %v961, 1.0
  %v964 = vrcp.pop %v962
  %v965 = vmul.f32 1.0, %v964
  %v966 = vrcp.pop %v963
  %v967 = vmul.f32 1.0, %v966
  %968 = vrot.lane.b32.xlu0 %v546, 64
  %v969 = vpop.permute.xlu0 %968
  %970 = vrot.lane.b32.xlu0 %v547, 64
  %v971 = vpop.permute.xlu0 %970
  %v974 = vmul.f32 %v965, %v969
  %v975 = vmul.f32 %v967, %v971
  %v976 = vld [vmem:[%s2 + $0x108] sm:$0xff]
  %v977 = vld [vmem:[%s2 + $0x118] sm:$0xff]
  %v978 = vld [vmem:[%s2 + $0x128] sm:$0xff]
  %v979 = vld [vmem:[%s2 + $0x138] sm:$0xff]
  %v980 = vld [vmem:[%s2 + $0x148] sm:$0xff]
  %v981 = vld [vmem:[%s2 + $0x158] sm:$0xff]
  %v982 = vld [vmem:[%s2 + $0x168] sm:$0xff]
  %v983 = vld [vmem:[%s2 + $0x178] sm:$0xff]
  %986 = vrot.lane.b32.xlu0 %v974, 64
  %v987 = vpop.permute.xlu0 %986
  %988 = vrot.lane.b32.xlu0 %v975, 64
  %v989 = vpop.permute.xlu0 %988
  %v990 = vsel %vm694, %v987, 0
  %v992 = vsel %vm694, %v989, 0
  %994 = vmatprep.subr.mxu0 0.0
  %995 = vmatpush1.msra.mxu0 %v976
  %996 = vmatprep.subr.mxu0 0.0
  %997 = vmatpush1.msra.mxu0 %v977
  %998 = vmatprep.subr.mxu0 0.0
  %999 = vmatpush1.msra.mxu0 %v978
  %1000 = vmatprep.subr.mxu0 0.0
  %1001 = vmatpush1.msra.mxu0 %v979
  %1002 = vmatprep.subr.mxu0 0.0
  %1003 = vmatpush1.msra.mxu0 %v980
  %1004 = vmatprep.subr.mxu0 0.0
  %1005 = vmatpush1.msra.mxu0 %v981
  %1006 = vmatprep.subr.mxu0 0.0
  %1007 = vmatpush1.msra.mxu0 %v982
  %1008 = vmatprep.subr.mxu0 0.0
  %1009 = vmatpush1.msra.mxu0 %v983
  %1010 = vmatprep.subr.mxu0 0.0
  %1011 = vmatpush1.msra.mxu0 0.0
  %1012 = vmatprep.subr.mxu0 0.0
  %1013 = vmatpush1.msra.mxu0 0.0
  %1014 = vmatprep.subr.mxu0 0.0
  %1015 = vmatpush1.msra.mxu0 0.0
  %1016 = vmatprep.subr.mxu0 0.0
  %1017 = vmatpush1.msra.mxu0 0.0
  %1018 = vmatprep.subr.mxu0 0.0
  %1019 = vmatpush1.msra.mxu0 0.0
  %1020 = vmatprep.subr.mxu0 0.0
  %1021 = vmatpush1.msra.mxu0 0.0
  %1022 = vmatprep.subr.mxu0 0.0
  %1023 = vmatpush1.msra.mxu0 0.0
  %1024 = vmatprep.subr.mxu0 0.0
  %1025 = vmatpush1.msra.mxu0 0.0
  %1026 = vmatprep.subr.mxu0 0.0
  %1027 = vmatpush1.msra.mxu0 0.0
  %1028 = vmatprep.subr.mxu0 0.0
  %1029 = vmatpush1.msra.mxu0 0.0
  %1030 = vmatprep.subr.mxu0 0.0
  %1031 = vmatpush1.msra.mxu0 0.0
  %1032 = vmatprep.subr.mxu0 0.0
  %1033 = vmatpush1.msra.mxu0 0.0
  %1034 = vmatprep.subr.mxu0 0.0
  %1035 = vmatpush1.msra.mxu0 0.0
  %1036 = vmatprep.subr.mxu0 0.0
  %1037 = vmatpush1.msra.mxu0 0.0
  %1038 = vmatprep.subr.mxu0 0.0
  %1039 = vmatpush1.msra.mxu0 0.0
  %1040 = vmatprep.subr.mxu0 0.0
  %1041 = vmatpush1.msra.mxu0 0.0
  %1042 = vmatprep.subr.mxu0 0.0
  %1043 = vmatpush1.msra.mxu0 0.0
  %1044 = vmatprep.subr.mxu0 0.0
  %1045 = vmatpush1.msra.mxu0 0.0
  %1046 = vmatprep.subr.mxu0 0.0
  %1047 = vmatpush1.msra.mxu0 0.0
  %1048 = vmatprep.subr.mxu0 0.0
  %1049 = vmatpush1.msra.mxu0 0.0
  %1050 = vmatprep.subr.mxu0 0.0
  %1051 = vmatpush1.msra.mxu0 0.0
  %1052 = vmatprep.subr.mxu0 0.0
  %1053 = vmatpush1.msra.mxu0 0.0
  %1054 = vmatprep.subr.mxu0 0.0
  %1055 = vmatpush1.msra.mxu0 0.0
  %1056 = vmatprep.subr.mxu0 0.0
  %1057 = vmatpush1.msra.mxu0 0.0
  %1058 = vmatprep.mubr.f32.mxu0 0.0
  %1059 = vmatmul.mubr.f32.gmra.mrb[0].mxu0 %v990
  %v1060 = vpop.f32.mrb[0].mxu0
  %v1061 = vadd.f32 0.0, %v1060
  %v1062 = vpop.f32.mrb[0].mxu0
  %1063 = vmatprep.mubr.f32.mxu0 0.0
  %1064 = vmatmul.mubr.f32.gmra.mrb[0].mxu0 %v992
  %v1065 = vpop.f32.mrb[0].mxu0
  %v1066 = vadd.f32 0.0, %v1065
  %v1067 = vpop.f32.mrb[0].mxu0
  %1068 = vdwg.mxu0
  %v1069 = vadd.f32 %v862, %v1061
  %v1070 = vadd.f32 %v864, %v1066
  %v1071 = vtanh.pop %v1069
  %v1072 = vtanh.pop %v1070
  %v1073 = vsub.f32 %v1071, %v546
  %v1074 = vsub.f32 %v1072, %v547
  %v1075 = vmul.f32 %v965, %v1073
  %v1076 = vmul.f32 %v967, %v1074
  %v1077 = vadd.f32 %v546, %v1075
  %v1078 = vadd.f32 %v547, %v1076
  %1079 = vmatprep.subr.mxu0 0.0
  %1080 = vmatpush1.msra.mxu0 %v1077
  %1081 = vmatprep.subr.mxu0 0.0
  %1082 = vmatpush1.msra.mxu0 %v1078
  %1083 = vmatprep.subr.mxu0 0.0
  %1084 = vmatpush1.msra.mxu0 0.0
  %1085 = vmatprep.subr.mxu0 0.0
  %1086 = vmatpush1.msra.mxu0 0.0
  %1087 = vmatprep.subr.mxu0 0.0
  %1088 = vmatpush1.msra.mxu0 0.0
  %1089 = vmatprep.subr.mxu0 0.0
  %1090 = vmatpush1.msra.mxu0 0.0
  %1091 = vmatprep.subr.mxu0 0.0
  %1092 = vmatpush1.msra.mxu0 0.0
  %1093 = vmatprep.subr.mxu0 0.0
  %1094 = vmatpush1.msra.mxu0 0.0
  %1095 = vmatprep.subr.mxu0 0.0
  %1096 = vmatpush1.msra.mxu0 0.0
  %1097 = vmatprep.subr.mxu0 0.0
  %1098 = vmatpush1.msra.mxu0 0.0
  %1099 = vmatprep.subr.mxu0 0.0
  %1100 = vmatpush1.msra.mxu0 0.0
  %1101 = vmatprep.subr.mxu0 0.0
  %1102 = vmatpush1.msra.mxu0 0.0
  %1103 = vmatprep.subr.mxu0 0.0
  %1104 = vmatpush1.msra.mxu0 0.0
  %1105 = vmatprep.subr.mxu0 0.0
  %1106 = vmatpush1.msra.mxu0 0.0
  %1107 = vmatprep.subr.mxu0 0.0
  %1108 = vmatpush1.msra.mxu0 0.0
  %1109 = vmatprep.subr.mxu0 0.0
  %1110 = vmatpush1.msra.mxu0 0.0
  %1111 = vmatprep.subr.mxu0 0.0
  %1112 = vmatpush1.msra.mxu0 0.0
  %1113 = vmatprep.subr.mxu0 0.0
  %1114 = vmatpush1.msra.mxu0 0.0
  %1115 = vmatprep.subr.mxu0 0.0
  %1116 = vmatpush1.msra.mxu0 0.0
  %1117 = vmatprep.subr.mxu0 0.0
  %1118 = vmatpush1.msra.mxu0 0.0
  %1119 = vmatprep.subr.mxu0 0.0
  %1120 = vmatpush1.msra.mxu0 0.0
  %1121 = vmatprep.subr.mxu0 0.0
  %1122 = vmatpush1.msra.mxu0 0.0
  %1123 = vmatprep.subr.mxu0 0.0
  %1124 = vmatpush1.msra.mxu0 0.0
  %1125 = vmatprep.subr.mxu0 0.0
  %1126 = vmatpush1.msra.mxu0 0.0
  %1127 = vmatprep.subr.mxu0 0.0
  %1128 = vmatpush1.msra.mxu0 0.0
  %1129 = vmatprep.subr.mxu0 0.0
  %1130 = vmatpush1.msra.mxu0 0.0
  %1131 = vmatprep.subr.mxu0 0.0
  %1132 = vmatpush1.msra.mxu0 0.0
  %1133 = vmatprep.subr.mxu0 0.0
  %1134 = vmatpush1.msra.mxu0 0.0
  %1135 = vmatprep.subr.mxu0 0.0
  %1136 = vmatpush1.msra.mxu0 0.0
  %1137 = vmatprep.subr.mxu0 0.0
  %1138 = vmatpush1.msra.mxu0 0.0
  %1139 = vmatprep.subr.mxu0 0.0
  %1140 = vmatpush1.msra.mxu0 0.0
  %1141 = vmatprep.subr.mxu0 0.0
  %1142 = vmatpush1.msra.mxu0 0.0
  %1143 = vmatprep.mubr.f32.mxu0 0.0
  %1144 = vmatmul.mubr.f32.gmra.mrb[0].mxu0 %v566
  %v1145 = vpop.f32.mrb[0].mxu0
  %v1146 = vadd.f32 0.0, %v1145
  %v1147 = vpop.f32.mrb[0].mxu0
  %1148 = vmatprep.mubr.f32.mxu0 0.0
  %1149 = vmatmul.mubr.f32.gmra.mrb[0].mxu0 %v569
  %v1150 = vpop.f32.mrb[0].mxu0
  %v1151 = vadd.f32 0.0, %v1150
  %v1152 = vpop.f32.mrb[0].mxu0
  %1153 = vmatprep.mubr.f32.mxu0 0.0
  %1154 = vmatmul.mubr.f32.gmra.mrb[0].mxu0 %v572
  %v1155 = vpop.f32.mrb[0].mxu0
  %v1156 = vadd.f32 0.0, %v1155
  %v1157 = vpop.f32.mrb[0].mxu0
  %1158 = vmatprep.mubr.f32.mxu0 0.0
  %1159 = vmatmul.mubr.f32.gmra.mrb[0].mxu0 %v575
  %v1160 = vpop.f32.mrb[0].mxu0
  %v1161 = vadd.f32 0.0, %v1160
  %v1162 = vpop.f32.mrb[0].mxu0
  %1163 = vdwg.mxu0
  %v1165 = vsel %vm694, %v1156, 0
  %v1168 = vsel %vm694, %v1161, 0
  %1170 = vmatprep.subr.mxu0 %v679
  %1171 = vmatpush1.msra.mxu0 %v678
  %1172 = vmatprep.subr.mxu0 %v681
  %1173 = vmatpush1.msra.mxu0 %v680
  %1174 = vmatprep.subr.mxu0 %v683
  %1175 = vmatpush1.msra.mxu0 %v682
  %1176 = vmatprep.subr.mxu0 %v685
  %1177 = vmatpush1.msra.mxu0 %v684
  %1178 = vmatprep.subr.mxu0 %v687
  %1179 = vmatpush1.msra.mxu0 %v686
  %1180 = vmatprep.subr.mxu0 %v689
  %1181 = vmatpush1.msra.mxu0 %v688
  %1182 = vmatprep.subr.mxu0 %v691
  %1183 = vmatpush1.msra.mxu0 %v690
  %1184 = vmatprep.subr.mxu0 %v693
  %1185 = vmatpush1.msra.mxu0 %v692
  %1186 = vmatprep.subr.mxu0 0.0
  %1187 = vmatpush1.msra.mxu0 0.0
  %1188 = vmatprep.subr.mxu0 0.0
  %1189 = vmatpush1.msra.mxu0 0.0
  %1190 = vmatprep.subr.mxu0 0.0
  %1191 = vmatpush1.msra.mxu0 0.0
  %1192 = vmatprep.subr.mxu0 0.0
  %1193 = vmatpush1.msra.mxu0 0.0
  %1194 = vmatprep.subr.mxu0 0.0
  %1195 = vmatpush1.msra.mxu0 0.0
  %1196 = vmatprep.subr.mxu0 0.0
  %1197 = vmatpush1.msra.mxu0 0.0
  %1198 = vmatprep.subr.mxu0 0.0
  %1199 = vmatpush1.msra.mxu0 0.0
  %1200 = vmatprep.subr.mxu0 0.0
  %1201 = vmatpush1.msra.mxu0 0.0
  %1202 = vmatprep.subr.mxu0 0.0
  %1203 = vmatpush1.msra.mxu0 0.0
  %1204 = vmatprep.subr.mxu0 0.0
  %1205 = vmatpush1.msra.mxu0 0.0
  %1206 = vmatprep.subr.mxu0 0.0
  %1207 = vmatpush1.msra.mxu0 0.0
  %1208 = vmatprep.subr.mxu0 0.0
  %1209 = vmatpush1.msra.mxu0 0.0
  %1210 = vmatprep.subr.mxu0 0.0
  %1211 = vmatpush1.msra.mxu0 0.0
  %1212 = vmatprep.subr.mxu0 0.0
  %1213 = vmatpush1.msra.mxu0 0.0
  %1214 = vmatprep.subr.mxu0 0.0
  %1215 = vmatpush1.msra.mxu0 0.0
  %1216 = vmatprep.subr.mxu0 0.0
  %1217 = vmatpush1.msra.mxu0 0.0
  %1218 = vmatprep.subr.mxu0 0.0
  %1219 = vmatpush1.msra.mxu0 0.0
  %1220 = vmatprep.subr.mxu0 0.0
  %1221 = vmatpush1.msra.mxu0 0.0
  %1222 = vmatprep.subr.mxu0 0.0
  %1223 = vmatpush1.msra.mxu0 0.0
  %1224 = vmatprep.subr.mxu0 0.0
  %1225 = vmatpush1.msra.mxu0 0.0
  %1226 = vmatprep.subr.mxu0 0.0
  %1227 = vmatpush1.msra.mxu0 0.0
  %1228 = vmatprep.subr.mxu0 0.0
  %1229 = vmatpush1.msra.mxu0 0.0
  %1230 = vmatprep.subr.mxu0 0.0
  %1231 = vmatpush1.msra.mxu0 0.0
  %1232 = vmatprep.subr.mxu0 0.0
  %1233 = vmatpush1.msra.mxu0 0.0
  %1234 = vmatprep.mubr.f32.mxu0 0.0
  %1235 = vmatmul.mubr.f32.gmra.mrb[0].mxu0 %v1165
  %v1236 = vpop.f32.mrb[0].mxu0
  %v1237 = vadd.f32 0.0, %v1236
  %v1238 = vpop.f32.mrb[0].mxu0
  %v1239 = vadd.f32 0.0, %v1238
  %1240 = vmatprep.mubr.f32.mxu0 0.0
  %1241 = vmatmul.mubr.f32.gmra.mrb[0].mxu0 %v1168
  %v1242 = vpop.f32.mrb[0].mxu0
  %v1243 = vadd.f32 0.0, %v1242
  %v1244 = vpop.f32.mrb[0].mxu0
  %v1245 = vadd.f32 0.0, %v1244
  %1246 = vdwg.mxu0
  %v1248 = vsel %vm694, %v1146, 0
  %v1251 = vsel %vm694, %v1151, 0
  %1253 = vmatprep.subr.mxu0 %v663
  %1254 = vmatpush1.msra.mxu0 %v662
  %1255 = vmatprep.subr.mxu0 %v665
  %1256 = vmatpush1.msra.mxu0 %v664
  %1257 = vmatprep.subr.mxu0 %v667
  %1258 = vmatpush1.msra.mxu0 %v666
  %1259 = vmatprep.subr.mxu0 %v669
  %1260 = vmatpush1.msra.mxu0 %v668
  %1261 = vmatprep.subr.mxu0 %v671
  %1262 = vmatpush1.msra.mxu0 %v670
  %1263 = vmatprep.subr.mxu0 %v673
  %1264 = vmatpush1.msra.mxu0 %v672
  %1265 = vmatprep.subr.mxu0 %v675
  %1266 = vmatpush1.msra.mxu0 %v674
  %1267 = vmatprep.subr.mxu0 %v677
  %1268 = vmatpush1.msra.mxu0 %v676
  %1269 = vmatprep.subr.mxu0 0.0
  %1270 = vmatpush1.msra.mxu0 0.0
  %1271 = vmatprep.subr.mxu0 0.0
  %1272 = vmatpush1.msra.mxu0 0.0
  %1273 = vmatprep.subr.mxu0 0.0
  %1274 = vmatpush1.msra.mxu0 0.0
  %1275 = vmatprep.subr.mxu0 0.0
  %1276 = vmatpush1.msra.mxu0 0.0
  %1277 = vmatprep.subr.mxu0 0.0
  %1278 = vmatpush1.msra.mxu0 0.0
  %1279 = vmatprep.subr.mxu0 0.0
  %1280 = vmatpush1.msra.mxu0 0.0
  %1281 = vmatprep.subr.mxu0 0.0
  %1282 = vmatpush1.msra.mxu0 0.0
  %1283 = vmatprep.subr.mxu0 0.0
  %1284 = vmatpush1.msra.mxu0 0.0
  %1285 = vmatprep.subr.mxu0 0.0
  %1286 = vmatpush1.msra.mxu0 0.0
  %1287 = vmatprep.subr.mxu0 0.0
  %1288 = vmatpush1.msra.mxu0 0.0
  %1289 = vmatprep.subr.mxu0 0.0
  %1290 = vmatpush1.msra.mxu0 0.0
  %1291 = vmatprep.subr.mxu0 0.0
  %1292 = vmatpush1.msra.mxu0 0.0
  %1293 = vmatprep.subr.mxu0 0.0
  %1294 = vmatpush1.msra.mxu0 0.0
  %1295 = vmatprep.subr.mxu0 0.0
  %1296 = vmatpush1.msra.mxu0 0.0
  %1297 = vmatprep.subr.mxu0 0.0
  %1298 = vmatpush1.msra.mxu0 0.0
  %1299 = vmatprep.subr.mxu0 0.0
  %1300 = vmatpush1.msra.mxu0 0.0
  %1301 = vmatprep.subr.mxu0 0.0
  %1302 = vmatpush1.msra.mxu0 0.0
  %1303 = vmatprep.subr.mxu0 0.0
  %1304 = vmatpush1.msra.mxu0 0.0
  %1305 = vmatprep.subr.mxu0 0.0
  %1306 = vmatpush1.msra.mxu0 0.0
  %1307 = vmatprep.subr.mxu0 0.0
  %1308 = vmatpush1.msra.mxu0 0.0
  %1309 = vmatprep.subr.mxu0 0.0
  %1310 = vmatpush1.msra.mxu0 0.0
  %1311 = vmatprep.subr.mxu0 0.0
  %1312 = vmatpush1.msra.mxu0 0.0
  %1313 = vmatprep.subr.mxu0 0.0
  %1314 = vmatpush1.msra.mxu0 0.0
  %1315 = vmatprep.subr.mxu0 0.0
  %1316 = vmatpush1.msra.mxu0 0.0
  %1317 = vmatprep.mubr.f32.mxu0 0.0
  %1318 = vmatmul.mubr.f32.gmra.mrb[0].mxu0 %v1248
  %v1319 = vpop.f32.mrb[0].mxu0
  %v1320 = vadd.f32 %v1237, %v1319
  %v1321 = vpop.f32.mrb[0].mxu0
  %v1322 = vadd.f32 %v1239, %v1321
  %1323 = vmatprep.mubr.f32.mxu0 0.0
  %1324 = vmatmul.mubr.f32.gmra.mrb[0].mxu0 %v1251
  %v1325 = vpop.f32.mrb[0].mxu0
  %v1326 = vadd.f32 %v1243, %v1325
  %v1327 = vpop.f32.mrb[0].mxu0
  %v1328 = vadd.f32 %v1245, %v1327
  %1329 = vdwg.mxu0
  %v1330 = vadd.f32 %v1320, %v558
  %v1331 = vadd.f32 %v1322, %v562
  %v1332 = vadd.f32 %v1326, %v558
  %v1333 = vadd.f32 %v1328, %v562
  %v1335 = vsel %vm694, %v1077, 0
  %v1338 = vsel %vm694, %v1078, 0
  %1340 = vmatprep.subr.mxu0 0.0
  %1341 = vmatpush1.msra.mxu0 %v865
  %1342 = vmatprep.subr.mxu0 0.0
  %1343 = vmatpush1.msra.mxu0 %v866
  %1344 = vmatprep.subr.mxu0 0.0
  %1345 = vmatpush1.msra.mxu0 %v867
  %1346 = vmatprep.subr.mxu0 0.0
  %1347 = vmatpush1.msra.mxu0 %v868
  %1348 = vmatprep.subr.mxu0 0.0
  %1349 = vmatpush1.msra.mxu0 %v869
  %1350 = vmatprep.subr.mxu0 0.0
  %1351 = vmatpush1.msra.mxu0 %v870
  %1352 = vmatprep.subr.mxu0 0.0
  %1353 = vmatpush1.msra.mxu0 %v871
  %1354 = vmatprep.subr.mxu0 0.0
  %1355 = vmatpush1.msra.mxu0 %v872
  %1356 = vmatprep.subr.mxu0 0.0
  %1357 = vmatpush1.msra.mxu0 0.0
  %1358 = vmatprep.subr.mxu0 0.0
  %1359 = vmatpush1.msra.mxu0 0.0
  %1360 = vmatprep.subr.mxu0 0.0
  %1361 = vmatpush1.msra.mxu0 0.0
  %1362 = vmatprep.subr.mxu0 0.0
  %1363 = vmatpush1.msra.mxu0 0.0
  %1364 = vmatprep.subr.mxu0 0.0
  %1365 = vmatpush1.msra.mxu0 0.0
  %1366 = vmatprep.subr.mxu0 0.0
  %1367 = vmatpush1.msra.mxu0 0.0
  %1368 = vmatprep.subr.mxu0 0.0
  %1369 = vmatpush1.msra.mxu0 0.0
  %1370 = vmatprep.subr.mxu0 0.0
  %1371 = vmatpush1.msra.mxu0 0.0
  %1372 = vmatprep.subr.mxu0 0.0
  %1373 = vmatpush1.msra.mxu0 0.0
  %1374 = vmatprep.subr.mxu0 0.0
  %1375 = vmatpush1.msra.mxu0 0.0
  %1376 = vmatprep.subr.mxu0 0.0
  %1377 = vmatpush1.msra.mxu0 0.0
  %1378 = vmatprep.subr.mxu0 0.0
  %1379 = vmatpush1.msra.mxu0 0.0
  %1380 = vmatprep.subr.mxu0 0.0
  %1381 = vmatpush1.msra.mxu0 0.0
  %1382 = vmatprep.subr.mxu0 0.0
  %1383 = vmatpush1.msra.mxu0 0.0
  %1384 = vmatprep.subr.mxu0 0.0
  %1385 = vmatpush1.msra.mxu0 0.0
  %1386 = vmatprep.subr.mxu0 0.0
  %1387 = vmatpush1.msra.mxu0 0.0
  %1388 = vmatprep.subr.mxu0 0.0
  %1389 = vmatpush1.msra.mxu0 0.0
  %1390 = vmatprep.subr.mxu0 0.0
  %1391 = vmatpush1.msra.mxu0 0.0
  %1392 = vmatprep.subr.mxu0 0.0
  %1393 = vmatpush1.msra.mxu0 0.0
  %1394 = vmatprep.subr.mxu0 0.0
  %1395 = vmatpush1.msra.mxu0 0.0
  %1396 = vmatprep.subr.mxu0 0.0
  %1397 = vmatpush1.msra.mxu0 0.0
  %1398 = vmatprep.subr.mxu0 0.0
  %1399 = vmatpush1.msra.mxu0 0.0
  %1400 = vmatprep.subr.mxu0 0.0
  %1401 = vmatpush1.msra.mxu0 0.0
  %1402 = vmatprep.subr.mxu0 0.0
  %1403 = vmatpush1.msra.mxu0 0.0
  %1404 = vmatprep.mubr.f32.mxu0 0.0
  %1405 = vmatmul.mubr.f32.gmra.mrb[0].mxu0 %v1335
  %v1406 = vpop.f32.mrb[0].mxu0
  %v1407 = vadd.f32 0.0, %v1406
  %v1408 = vpop.f32.mrb[0].mxu0
  %1409 = vmatprep.mubr.f32.mxu0 0.0
  %1410 = vmatmul.mubr.f32.gmra.mrb[0].mxu0 %v1338
  %v1411 = vpop.f32.mrb[0].mxu0
  %v1412 = vadd.f32 0.0, %v1411
  %v1413 = vpop.f32.mrb[0].mxu0
  %1414 = vdwg.mxu0
  %v1415 = vadd.f32 %v1330, %v1407
  %v1416 = vadd.f32 %v1332, %v1412
  %v1417 = vxor.u32 %v1415, 2147483648
  %v1418 = vxor.u32 %v1416, 2147483648
  %v1419 = vmul.f32 %v1417, 1.442695
  %v1420 = vpow.pop %v1419
  %v1421 = vmul.f32 %v1418, 1.442695
  %v1422 = vpow.pop %v1421
  %v1423 = vadd.f32 %v1420, 1.0
  %v1424 = vadd.f32 %v1422, 1.0
  %v1425 = vrcp.pop %v1423
  %v1426 = vmul.f32 1.0, %v1425
  %v1427 = vrcp.pop %v1424
  %v1428 = vmul.f32 1.0, %v1427
  %1429 = vrot.lane.b32.xlu0 %v1077, 64
  %v1430 = vpop.permute.xlu0 %1429
  %1431 = vrot.lane.b32.xlu0 %v1078, 64
  %v1432 = vpop.permute.xlu0 %1431
  %v1435 = vmul.f32 %v1426, %v1430
  %v1436 = vmul.f32 %v1428, %v1432
  %1439 = vrot.lane.b32.xlu0 %v1435, 64
  %v1440 = vpop.permute.xlu0 %1439
  %1441 = vrot.lane.b32.xlu0 %v1436, 64
  %v1442 = vpop.permute.xlu0 %1441
  %v1443 = vsel %vm694, %v1440, 0
  %v1445 = vsel %vm694, %v1442, 0
  %1447 = vmatprep.subr.mxu0 0.0
  %1448 = vmatpush1.msra.mxu0 %v976
  %1449 = vmatprep.subr.mxu0 0.0
  %1450 = vmatpush1.msra.mxu0 %v977
  %1451 = vmatprep.subr.mxu0 0.0
  %1452 = vmatpush1.msra.mxu0 %v978
  %1453 = vmatprep.subr.mxu0 0.0
  %1454 = vmatpush1.msra.mxu0 %v979
  %1455 = vmatprep.subr.mxu0 0.0
  %1456 = vmatpush1.msra.mxu0 %v980
  %1457 = vmatprep.subr.mxu0 0.0
  %1458 = vmatpush1.msra.mxu0 %v981
  %1459 = vmatprep.subr.mxu0 0.0
  %1460 = vmatpush1.msra.mxu0 %v982
  %1461 = vmatprep.subr.mxu0 0.0
  %1462 = vmatpush1.msra.mxu0 %v983
  %1463 = vmatprep.subr.mxu0 0.0
  %1464 = vmatpush1.msra.mxu0 0.0
  %1465 = vmatprep.subr.mxu0 0.0
  %1466 = vmatpush1.msra.mxu0 0.0
  %1467 = vmatprep.subr.mxu0 0.0
  %1468 = vmatpush1.msra.mxu0 0.0
  %1469 = vmatprep.subr.mxu0 0.0
  %1470 = vmatpush1.msra.mxu0 0.0
  %1471 = vmatprep.subr.mxu0 0.0
  %1472 = vmatpush1.msra.mxu0 0.0
  %1473 = vmatprep.subr.mxu0 0.0
  %1474 = vmatpush1.msra.mxu0 0.0
  %1475 = vmatprep.subr.mxu0 0.0
  %1476 = vmatpush1.msra.mxu0 0.0
  %1477 = vmatprep.subr.mxu0 0.0
  %1478 = vmatpush1.msra.mxu0 0.0
  %1479 = vmatprep.subr.mxu0 0.0
  %1480 = vmatpush1.msra.mxu0 0.0
  %1481 = vmatprep.subr.mxu0 0.0
  %1482 = vmatpush1.msra.mxu0 0.0
  %1483 = vmatprep.subr.mxu0 0.0
  %1484 = vmatpush1.msra.mxu0 0.0
  %1485 = vmatprep.subr.mxu0 0.0
  %1486 = vmatpush1.msra.mxu0 0.0
  %1487 = vmatprep.subr.mxu0 0.0
  %1488 = vmatpush1.msra.mxu0 0.0
  %1489 = vmatprep.subr.mxu0 0.0
  %1490 = vmatpush1.msra.mxu0 0.0
  %1491 = vmatprep.subr.mxu0 0.0
  %1492 = vmatpush1.msra.mxu0 0.0
  %1493 = vmatprep.subr.mxu0 0.0
  %1494 = vmatpush1.msra.mxu0 0.0
  %1495 = vmatprep.subr.mxu0 0.0
  %1496 = vmatpush1.msra.mxu0 0.0
  %1497 = vmatprep.subr.mxu0 0.0
  %1498 = vmatpush1.msra.mxu0 0.0
  %1499 = vmatprep.subr.mxu0 0.0
  %1500 = vmatpush1.msra.mxu0 0.0
  %1501 = vmatprep.subr.mxu0 0.0
  %1502 = vmatpush1.msra.mxu0 0.0
  %1503 = vmatprep.subr.mxu0 0.0
  %1504 = vmatpush1.msra.mxu0 0.0
  %1505 = vmatprep.subr.mxu0 0.0
  %1506 = vmatpush1.msra.mxu0 0.0
  %1507 = vmatprep.subr.mxu0 0.0
  %1508 = vmatpush1.msra.mxu0 0.0
  %1509 = vmatprep.subr.mxu0 0.0
  %1510 = vmatpush1.msra.mxu0 0.0
  %1511 = vmatprep.mubr.f32.mxu0 0.0
  %1512 = vmatmul.mubr.f32.gmra.mrb[0].mxu0 %v1443
  %v1513 = vpop.f32.mrb[0].mxu0
  %v1514 = vadd.f32 0.0, %v1513
  %v1515 = vpop.f32.mrb[0].mxu0
  %1516 = vmatprep.mubr.f32.mxu0 0.0
  %1517 = vmatmul.mubr.f32.gmra.mrb[0].mxu0 %v1445
  %v1518 = vpop.f32.mrb[0].mxu0
  %v1519 = vadd.f32 0.0, %v1518
  %v1520 = vpop.f32.mrb[0].mxu0
  %1521 = vdwg.mxu0
  %v1522 = vadd.f32 %v1331, %v1514
  %v1523 = vadd.f32 %v1333, %v1519
  %v1524 = vtanh.pop %v1522
  %v1525 = vtanh.pop %v1523
  %v1526 = vsub.f32 %v1524, %v1077
  %v1527 = vsub.f32 %v1525, %v1078
  %v1528 = vmul.f32 %v1426, %v1526
  %v1529 = vmul.f32 %v1428, %v1527
  %v1530 = vadd.f32 %v1077, %v1528
  %v1531 = vadd.f32 %v1078, %v1529
  %v1532 = vld [vmem:[%s2 + $0x180] sm:$0xff]
  %v1533 = vld [vmem:[%s2 + $0x190] sm:$0xff]
  %v1534 = vld [vmem:[%s2 + $0x188] sm:$0xff]
  %v1535 = vld [vmem:[%s2 + $0x198] sm:$0xff]
  %v1536 = vmul.f32 %v546, %v1532
  %v1537 = vmul.f32 %v547, %v1533
  %v1538 = vsel %vm694, %v1536, 0.0
  %1539 = vadd.xlane.f32.xlu0 %v1538
  %v1540 = vpop.xlane.xlu0 %1539
  %v1541 = vsel %vm694, %v1537, 0.0
  %1542 = vadd.xlane.f32.xlu0 %v1541
  %v1543 = vpop.xlane.xlu0 %1542
  %1546 = vrot.lane.b32.xlu0 %v1532, 64
  %v1547 = vpop.permute.xlu0 %1546
  %1548 = vrot.lane.b32.xlu0 %v1533, 64
  %v1549 = vpop.permute.xlu0 %1548
  %v1552 = vmul.f32 %v1530, %v1547
  %v1553 = vmul.f32 %v1531, %v1549
  %v1554 = vsel %vm694, %v1552, 0.0
  %1555 = vadd.xlane.f32.xlu0 %v1554
  %v1556 = vpop.xlane.xlu0 %1555
  %v1557 = vsel %vm694, %v1553, 0.0
  %1558 = vadd.xlane.f32.xlu0 %v1557
  %v1559 = vpop.xlane.xlu0 %1558
  %v1560 = vadd.f32 %v1540, %v1556
  %v1561 = vadd.f32 %v1543, %v1559
  %v1562 = vadd.f32 %v1560, %v1534
  %v1563 = vadd.f32 %v1561, %v1535
  %1566 = vrot.lane.b32.xlu0 %v1562, 16
  %v1567 = vpop.permute.xlu0 %1566
  %1568 = vrot.lane.b32.xlu0 %v1563, 16
  %v1569 = vpop.permute.xlu0 %1568
  %v1572 = vsel %vm27, %v454, %v1567
  %v1573 = vsel %vm27, %v456, %v1569
  %vm1574 = vcmask 138240
  %1575 = vst.msk [vmem:[%s3] sm:$0xff] %vm1574, %v1572
  %1576 = vst.msk [vmem:[%s3 + $0x8] sm:$0xff] %vm1574, %v1573
  // Predicated region
  $region14: #{kgenet_forward.1} parent=0 // pred_check
    _
  $region15: #{kgenet_forward.1} parent=0 // pred_check_branch
    %1578 = sbr.rel (0) target = $region17
  $region16: #{kgenet_forward.1} parent=0 // pred_region
    _
  $region17: #{kgenet_forward.1} parent=0 // pred_fallthru
    _
  // Predicated region
  $region18: #{kgenet_forward.1} parent=0 // pred_check
    _
  $region19: #{kgenet_forward.1} parent=0 // pred_check_branch
    %1580 = sbr.rel (0) target = $region21
  $region20: #{kgenet_forward.1} parent=0 // pred_region
    _
  $region21: #{kgenet_forward.1} parent=0 // pred_fallthru
    _

</llo_original>
